<compile_context>
chip_gen: v6e
topology: v6e:2x2x1
jax: 0.10.0
libtpu: 0.0.40
codegen_flags: <defaults>
</compile_context>

<pallas_src>
import functools
import math

import jax
import jax.numpy as jnp
from jax import lax
from jax.experimental import pallas as pl
from jax.experimental.pallas import tpu as pltpu


def _flash_attn_kernel(q_ref, k_ref, v_ref, o_ref,
                       qs_ref, m_ref, l_ref, acc_ref, *,
                       scale, num_heads, head_dim, block_q, block_kv,
                       kv_resident, causal, exp_dtype, mm_dtype):
    """One (batch, q-tile, kv-tile) grid step of online-softmax attention.

    Blocks (heads packed along the lane axis):
      q_ref: (1, block_q, H*D)
      k_ref/v_ref: (1, S, H*D) if kv_resident else (1, block_kv, H*D)
      o_ref: (1, block_q, H*D)
    Scratch (persist across the kv grid axis):
      qs_ref: (block_q, H*D) bf16 pre-scaled Q
      m_ref/l_ref: (H, block_q, 1) f32
      acc_ref: (block_q, H*D) f32 lane-dense accumulator
    """
    qi = pl.program_id(1)
    ki = pl.program_id(2)

    @pl.when(ki == 0)
    def _init():
        # Softmax scale folded into Q once per q tile (not per kv step, not
        # per (tq,tk) score).
        qs_ref[...] = (q_ref[0].astype(jnp.float32) * scale).astype(mm_dtype)
        m_ref[...] = jnp.full(m_ref.shape, -jnp.inf, dtype=m_ref.dtype)
        l_ref[...] = jnp.zeros(l_ref.shape, dtype=l_ref.dtype)
        acc_ref[...] = jnp.zeros(acc_ref.shape, dtype=acc_ref.dtype)

    def _step():
        if kv_resident:
            # K/V block holds the whole sequence; slice this kv window.
            start = pl.multiple_of(ki * block_kv, block_kv)
            k_all = k_ref[0, pl.ds(start, block_kv), :]     # (tk, H*D) bf16
            v_all = v_ref[0, pl.ds(start, block_kv), :]
        else:
            k_all = k_ref[0]
            v_all = v_ref[0]
        q_all = qs_ref[...]                                  # (tq, H*D) bf16

        if causal:
            rows = qi * block_q + lax.broadcasted_iota(
                jnp.int32, (block_q, block_kv), 0)
            cols = ki * block_kv + lax.broadcasted_iota(
                jnp.int32, (block_q, block_kv), 1)
            allow = cols <= rows

        acc_prev = acc_ref[...]                              # (tq, H*D) f32
        acc_parts = []
        for h in range(num_heads):   # static unroll; H is small, compile-time
            sl = slice(h * head_dim, (h + 1) * head_dim)
            qh = q_all[:, sl]                                # (tq, D)
            kh = k_all[:, sl]                                # (tk, D)
            vh = v_all[:, sl]                                # (tk, D)

            # scores = Q K^T (contract D of both operands; no explicit k.T)
            s = lax.dot_general(qh, kh, (((1,), (1,)), ((), ())),
                                preferred_element_type=jnp.float32)  # (tq,tk)
            if causal:
                # Large negative (not -inf) so m stays finite -> no NaN alpha.
                s = jnp.where(allow, s, -1e30)

            m_prev = m_ref[h]                                # (tq, 1) f32
            m_new = jnp.maximum(m_prev, jnp.max(s, axis=-1, keepdims=True))
            alpha = jnp.exp(m_prev - m_new)                  # f32 rescale
            # exp in bf16 on v6e/v7x (bf16 EUP), f32 on v5e.
            p = jnp.exp((s - m_new).astype(exp_dtype))       # (tq, tk)

            # TODO(synk): if the bundle dump shows XLU saturation at large
            # block_kv, move this row-sum onto the MXU (p @ ones).
            l_ref[h] = alpha * l_ref[h] + jnp.sum(
                p.astype(jnp.float32), axis=-1, keepdims=True)
            m_ref[h] = m_new

            pv = jnp.dot(p.astype(mm_dtype), vh,
                         preferred_element_type=jnp.float32)  # (tq, D) f32
            acc_parts.append(alpha * acc_prev[:, sl] + pv)

        # Single lane-dense (tq, H*D) accumulator store per step.
        acc_ref[...] = jnp.concatenate(acc_parts, axis=-1)

    if causal:
        # Skip kv tiles entirely above the diagonal.
        pl.when(ki * block_kv < (qi + 1) * block_q)(_step)
    else:
        _step()

    @pl.when(ki == pl.num_programs(2) - 1)
    def _finalize():
        invs = [jnp.broadcast_to(pl.reciprocal(l_ref[h], approx=True),
                                 (block_q, head_dim))
                for h in range(num_heads)]
        # Lane-dense (tq, H*D) store (unmasked 128-wide vst).
        o_ref[0] = (acc_ref[...] * jnp.concatenate(invs, axis=-1)
                    ).astype(o_ref.dtype)


def _pick_vmem_limit():
    # Leave ~25% headroom below physical VMEM (128 MiB v5e/v6e, 64 MiB v7x).
    try:
        cap = pltpu.get_tpu_info().vmem_capacity_bytes
        return int(cap * 3 // 4)
    except Exception:  # pragma: no cover - conservative fallback
        return None


def _exp_dtype_for_device():
    # bf16 EUP exists on v6e/v7x; keep f32 exp on v5e and older.
    try:
        kind = jax.devices()[0].device_kind.lower()
    except Exception:  # pragma: no cover
        return jnp.float32
    if any(tag in kind for tag in ("v2", "v3", "v4", "v5")):
        return jnp.float32
    return jnp.bfloat16


def _resident_plan_bytes(seq, block_q, hd, num_heads, itemsize):
    """VMEM bytes for the resident-K/V plan (Pallas double-buffers inputs)."""
    kv = 2 * 2 * seq * hd * itemsize          # K + V full-S blocks, 2 bufs each
    qo = 2 * 2 * block_q * hd * itemsize      # q tile in + o tile out, 2 bufs
    scratch = (block_q * hd * itemsize        # pre-scaled Q (bf16)
               + block_q * hd * 4             # f32 accumulator
               + 2 * num_heads * block_q * 128 * 4)  # m + l (lane-padded)
    return kv + qo + scratch


def _local_attention_pallas(qkv, softmax_scale, *, block_q, block_kv,
                            causal=False, kv_resident=None):
    """qkv: (B, S, 3, H, D) -> context (B, S, H, D). Flash attention on TPU."""
    B, S, three, H, D = qkv.shape
    assert three == 3
    HD = H * D
    # Lane-dense packing of heads along the last axis requires H*D % 128 == 0.
    assert HD % 128 == 0, "num_heads * head_dim must be a multiple of 128"
    # TODO(synk): pad H*D (and mask) for shapes that do not satisfy this.

    block_q = min(block_q, S)
    block_kv = min(block_kv, S)
    assert S % block_q == 0 and S % block_kv == 0, "S must divide tile sizes"
    # TODO(synk): handle ragged S with pl.BoundedSlice / masking.

    mm_dtype = jnp.bfloat16
    itemsize = jnp.dtype(mm_dtype).itemsize

    # Cast to bf16 once and repack into three contiguous (B, S, H*D) slabs so
    # every tile DMA reads contiguous rows (one extra HBM pass, amortized over
    # every later read of Q/K/V).
    qkv_b = qkv.astype(mm_dtype)
    q2 = qkv_b[:, :, 0].reshape(B, S, HD)
    k2 = qkv_b[:, :, 1].reshape(B, S, HD)
    v2 = qkv_b[:, :, 2].reshape(B, S, HD)

    vmem_limit = _pick_vmem_limit()
    budget = vmem_limit if vmem_limit is not None else (16 << 20)
    if kv_resident is None:
        kv_resident = (_resident_plan_bytes(S, block_q, HD, H, itemsize)
                       <= int(budget * 0.9))

    exp_dtype = _exp_dtype_for_device()

    grid = (B, S // block_q, S // block_kv)
    q_spec = pl.BlockSpec((1, block_q, HD), lambda b, qi, ki: (b, qi, 0))
    if kv_resident:
        # Block index depends only on b: K/V are fetched once per batch and
        # stay resident in VMEM across the whole (qi, ki) sub-grid.
        k_spec = pl.BlockSpec((1, S, HD), lambda b, qi, ki: (b, 0, 0))
        v_spec = pl.BlockSpec((1, S, HD), lambda b, qi, ki: (b, 0, 0))
    else:
        k_spec = pl.BlockSpec((1, block_kv, HD), lambda b, qi, ki: (b, ki, 0))
        v_spec = pl.BlockSpec((1, block_kv, HD), lambda b, qi, ki: (b, ki, 0))
    o_spec = pl.BlockSpec((1, block_q, HD), lambda b, qi, ki: (b, qi, 0))

    kernel = functools.partial(
        _flash_attn_kernel, scale=softmax_scale, num_heads=H, head_dim=D,
        block_q=block_q, block_kv=block_kv, kv_resident=kv_resident,
        causal=causal, exp_dtype=exp_dtype, mm_dtype=mm_dtype)

    flops = 4 * B * H * S * S * D            # QK^T + PV
    transc = B * H * S * S                   # exp
    if causal:
        flops //= 2
        transc //= 2
    if kv_resident:
        # q, k, v read once per batch; output written once.
        bytes_accessed = itemsize * B * S * HD * 4
    else:
        bytes_accessed = itemsize * B * S * HD * (2 + 2 * (S // block_q))
    cost = pl.CostEstimate(flops=flops, transcendentals=transc,
                           bytes_accessed=bytes_accessed)

    out = pl.pallas_call(
        kernel,
        out_shape=jax.ShapeDtypeStruct((B, S, HD), mm_dtype),
        grid_spec=pltpu.PrefetchScalarGridSpec(
            num_scalar_prefetch=0,
            grid=grid,
            in_specs=[q_spec, k_spec, v_spec],
            out_specs=o_spec,
            scratch_shapes=[
                pltpu.VMEM((block_q, HD), mm_dtype),        # pre-scaled Q
                pltpu.VMEM((H, block_q, 1), jnp.float32),   # running max m
                pltpu.VMEM((H, block_q, 1), jnp.float32),   # running sum l
                pltpu.VMEM((block_q, HD), jnp.float32),     # lane-dense acc
            ],
        ),
        compiler_params=pltpu.CompilerParams(
            # b and q-tile axes parallel (megacore on v7x: make sure
            # B * (S / block_q) >= 2 so both TensorCores get work).
            dimension_semantics=("parallel", "parallel", "arbitrary"),
            vmem_limit_bytes=vmem_limit,
        ),
        cost_estimate=cost,
    )(q2, k2, v2)

    return out.reshape(B, S, H, D).astype(qkv.dtype)   # free reshape + cast


def _seq_all_to_all(x, scatter_idx, gather_idx, world_size=1):
    # Reference: world_size <= 1 -> identity.
    if world_size <= 1:
        return x
    raise NotImplementedError  # TODO(synk): ring all-to-all via remote DMA.


def distributed_attention_forward(qkv, *, block_q=512, block_kv=1024,
                                  causal=False, world_size=1,
                                  kv_resident=None):
    """DistributedAttention.forward (qkv path, training mode).

    qkv: (B, S, 3, H, D) -> (B, S, H, D)

    Tile-size guidance: defaults (block_q=512, block_kv=1024) target the
    48-96 MiB VMEM budgets on all generations (vmem_limit_bytes overrides the
    16/32 MiB scoped default, so v5e does NOT need smaller tiles). When the
    full-sequence K/V fits the budget it is kept VMEM-resident per batch
    (fetched once); otherwise the kernel falls back to tiled K/V
    (kv_resident=False forces the fallback, e.g. very long S on v7x).
    """
    # first all-to-all: scatter_idx=2, gather_idx=0  (identity for world_size=1)
    qkv = _seq_all_to_all(qkv, 2, 0, world_size)

    D = qkv.shape[-1]
    softmax_scale = 1.0 / math.sqrt(D)
    context = _local_attention_pallas(qkv, softmax_scale,
                                      block_q=block_q, block_kv=block_kv,
                                      causal=causal, kv_resident=kv_resident)

    # second all-to-all: scatter_idx=0, gather_idx=1 (identity for world_size=1)
    context = _seq_all_to_all(context, 0, 1, world_size)
    return context


def _reference_attention(qkv, causal=False):
    """Pure-JAX f32 reference of the local attention for correctness check."""
    B, S, _, H, D = qkv.shape
    q, k, v = qkv[:, :, 0], qkv[:, :, 1], qkv[:, :, 2]
    scale = 1.0 / math.sqrt(D)
    s = jnp.einsum("bqhd,bkhd->bhqk",
                   q.astype(jnp.float32), k.astype(jnp.float32)) * scale
    if causal:
        mask = jnp.tril(jnp.ones((S, S), dtype=bool))
        s = jnp.where(mask[None, None], s, -jnp.inf)
    p = jax.nn.softmax(s, axis=-1)
    o = jnp.einsum("bhqk,bkhd->bqhd", p, v.astype(jnp.float32))
    return o


def _check(name, out, ref, shape):
    assert out.shape == shape, f"{name}: bad shape {out.shape}"
    err = jnp.abs(out.astype(jnp.float32) - ref)
    # bf16 activations + bf16 MXU (+ possibly bf16 exp) with f32 accumulation.
    assert jnp.allclose(out.astype(jnp.float32), ref, atol=7.5e-2, rtol=7.5e-2), (
        f"{name}: max abs err {float(err.max())}")
    assert float(err.mean()) < 2e-2, f"{name}: mean abs err {float(err.mean())}"


if __name__ == "__main__":
    key = jax.random.PRNGKey(0)
    B, S, H, D = 2, 256, 2, 64   # small but multi-tile (grid = (2, 2, 2))
    qkv = jax.random.normal(key, (B, S, 3, H, D), dtype=jnp.float32)

    ref = _reference_attention(qkv, causal=False)
    ref_c = _reference_attention(qkv, causal=True)

    # 1) Resident-K/V plan (auto-selected: fits VMEM at this size).
    out = jax.block_until_ready(
        distributed_attention_forward(qkv, block_q=128, block_kv=128))
    _check("resident", out, ref, (B, S, H, D))

    # 2) Tiled-K/V fallback plan (what very long S would use, e.g. on v7x).
    out_t = jax.block_until_ready(
        distributed_attention_forward(qkv, block_q=128, block_kv=128,
                                      kv_resident=False))
    _check("tiled", out_t, ref, (B, S, H, D))

    # 3) Causal mode (block-triangular skip + diagonal-tile mask).
    out_c = jax.block_until_ready(
        distributed_attention_forward(qkv, block_q=128, block_kv=128,
                                      causal=True))
    _check("causal", out_c, ref_c, (B, S, H, D))

    print("KERNEL_OK")
</pallas_src>

<mosaic_0001>
module attributes {stable_mosaic.version = 11 : i64} {
  func.func @_flash_attn_kernel(%arg0: i32, %arg1: i32, %arg2: i32, %arg3: memref<1x128x128xbf16, #tpu.memory_space<vmem>>, %arg4: memref<1x256x128xbf16, #tpu.memory_space<vmem>>, %arg5: memref<1x256x128xbf16, #tpu.memory_space<vmem>>, %arg6: memref<1x128x128xbf16, #tpu.memory_space<vmem>>, %arg7: memref<128x128xbf16, #tpu.memory_space<vmem>>, %arg8: memref<2x128x1xf32, #tpu.memory_space<vmem>>, %arg9: memref<2x128x1xf32, #tpu.memory_space<vmem>>, %arg10: memref<128x128xf32, #tpu.memory_space<vmem>>) attributes {dimension_semantics = [#tpu.dimension_semantics<parallel>, #tpu.dimension_semantics<parallel>, #tpu.dimension_semantics<arbitrary>], iteration_bounds = array<i64: 2, 2, 2>, scalar_prefetch = 0 : i64, scratch_operands = 4 : i64, tpu.core_type = #tpu.core_type<tc>, window_params = [{transform_indices = @transform_0, window_bounds = array<i64: 1, 128, 128>}, {transform_indices = @transform_1, window_bounds = array<i64: 1, 256, 128>}, {transform_indices = @transform_2, window_bounds = array<i64: 1, 256, 128>}, {transform_indices = @transform_3, window_bounds = array<i64: 1, 128, 128>}]} {
    %c0_i32 = arith.constant 0 : i32
    %0 = arith.cmpi eq, %arg2, %c0_i32 : i32
    %1 = arith.extui %0 : i1 to i32
    %c0_i32_0 = arith.constant 0 : i32
    %2 = arith.cmpi ne, %1, %c0_i32_0 : i32
    scf.if %2 {
      %c0_41 = arith.constant 0 : index
      %c0_42 = arith.constant 0 : index
      %c0_43 = arith.constant 0 : index
      %84 = vector.load %arg3[%c0_41, %c0_42, %c0_43] : memref<1x128x128xbf16, #tpu.memory_space<vmem>>, vector<1x128x128xbf16>
      %85 = vector.shape_cast %84 : vector<1x128x128xbf16> to vector<128x128xbf16>
      %86 = arith.extf %85 : vector<128x128xbf16> to vector<128x128xf32>
      %cst_44 = arith.constant 1.250000e-01 : f32
      %87 = vector.broadcast %cst_44 : f32 to vector<128x128xf32>
      %88 = arith.mulf %86, %87 : vector<128x128xf32>
      %89 = arith.truncf %88 : vector<128x128xf32> to vector<128x128xbf16>
      %c0_45 = arith.constant 0 : index
      %c0_46 = arith.constant 0 : index
      %90 = vector.load %arg7[%c0_45, %c0_46] : memref<128x128xbf16, #tpu.memory_space<vmem>>, vector<128x128xbf16>
      tpu.vector_store %arg7[%c0_45, %c0_46], %89 {strides = array<i32>} : memref<128x128xbf16, #tpu.memory_space<vmem>>, vector<128x128xbf16>,
      %cst_47 = arith.constant 0xFF800000 : f32
      %91 = vector.broadcast %cst_47 : f32 to vector<2x128x1xf32>
      %c0_48 = arith.constant 0 : index
      %c0_49 = arith.constant 0 : index
      %c0_50 = arith.constant 0 : index
      %92 = vector.load %arg8[%c0_48, %c0_49, %c0_50] : memref<2x128x1xf32, #tpu.memory_space<vmem>>, vector<2x128x1xf32>
      tpu.vector_store %arg8[%c0_48, %c0_49, %c0_50], %91 {strides = array<i32>} : memref<2x128x1xf32, #tpu.memory_space<vmem>>, vector<2x128x1xf32>,
      %cst_51 = arith.constant 0.000000e+00 : f32
      %93 = vector.broadcast %cst_51 : f32 to vector<2x128x1xf32>
      %c0_52 = arith.constant 0 : index
      %c0_53 = arith.constant 0 : index
      %c0_54 = arith.constant 0 : index
      %94 = vector.load %arg9[%c0_52, %c0_53, %c0_54] : memref<2x128x1xf32, #tpu.memory_space<vmem>>, vector<2x128x1xf32>
      tpu.vector_store %arg9[%c0_52, %c0_53, %c0_54], %93 {strides = array<i32>} : memref<2x128x1xf32, #tpu.memory_space<vmem>>, vector<2x128x1xf32>,
      %cst_55 = arith.constant 0.000000e+00 : f32
      %95 = vector.broadcast %cst_55 : f32 to vector<128x128xf32>
      %c0_56 = arith.constant 0 : index
      %c0_57 = arith.constant 0 : index
      %96 = vector.load %arg10[%c0_56, %c0_57] : memref<128x128xf32, #tpu.memory_space<vmem>>, vector<128x128xf32>
      tpu.vector_store %arg10[%c0_56, %c0_57], %95 {strides = array<i32>} : memref<128x128xf32, #tpu.memory_space<vmem>>, vector<128x128xf32>,
    } else {
    }
    %c128_i32 = arith.constant 128 : i32
    %3 = arith.muli %arg2, %c128_i32 : i32
    %4 = tpu.assume_multiple %3, 128 : i32
    %c0 = arith.constant 0 : index
    %5 = arith.index_cast %4 : i32 to index
    %c0_1 = arith.constant 0 : index
    %6 = vector.load %arg4[%c0, %5, %c0_1] : memref<1x256x128xbf16, #tpu.memory_space<vmem>>, vector<1x128x128xbf16>
    %7 = vector.shape_cast %6 : vector<1x128x128xbf16> to vector<128x128xbf16>
    %c0_2 = arith.constant 0 : index
    %8 = arith.index_cast %4 : i32 to index
    %c0_3 = arith.constant 0 : index
    %9 = vector.load %arg5[%c0_2, %8, %c0_3] : memref<1x256x128xbf16, #tpu.memory_space<vmem>>, vector<1x128x128xbf16>
    %10 = vector.shape_cast %9 : vector<1x128x128xbf16> to vector<128x128xbf16>
    %c0_4 = arith.constant 0 : index
    %c0_5 = arith.constant 0 : index
    %11 = vector.load %arg7[%c0_4, %c0_5] : memref<128x128xbf16, #tpu.memory_space<vmem>>, vector<128x128xbf16>
    %c0_6 = arith.constant 0 : index
    %c0_7 = arith.constant 0 : index
    %12 = vector.load %arg10[%c0_6, %c0_7] : memref<128x128xf32, #tpu.memory_space<vmem>>, vector<128x128xf32>
    %13 = vector.extract_strided_slice %11 {offsets = [0, 0], sizes = [128, 64], strides = [1, 1]} : vector<128x128xbf16> to vector<128x64xbf16>
    %14 = vector.extract_strided_slice %7 {offsets = [0, 0], sizes = [128, 64], strides = [1, 1]} : vector<128x128xbf16> to vector<128x64xbf16>
    %15 = vector.extract_strided_slice %10 {offsets = [0, 0], sizes = [128, 64], strides = [1, 1]} : vector<128x128xbf16> to vector<128x64xbf16>
    %cst = arith.constant dense<0.000000e+00> : vector<128x128xf32>
    %16 = tpu.matmul %13, %14, %cst {dimension_numbers = #tpu.dot_dimension_numbers<[1], [1], [0], [0], [0, 0, 1, 0], [], []>} : vector<128x64xbf16>, vector<128x64xbf16>, vector<128x128xf32> -> vector<128x128xf32>
    %c0_8 = arith.constant 0 : index
    %c0_9 = arith.constant 0 : index
    %c0_10 = arith.constant 0 : index
    %17 = vector.load %arg8[%c0_8, %c0_9, %c0_10] : memref<2x128x1xf32, #tpu.memory_space<vmem>>, vector<1x128x1xf32>
    %18 = vector.shape_cast %17 : vector<1x128x1xf32> to vector<128x1xf32>
    %cst_11 = arith.constant dense<0xFF800000> : vector<128xf32>
    %19 = vector.multi_reduction <maximumf>, %16, %cst_11 [1] : vector<128x128xf32> to vector<128xf32>
    %20 = vector.shape_cast %19 : vector<128xf32> to vector<128x1xf32>
    %21 = arith.maximumf %18, %20 : vector<128x1xf32>
    %22 = arith.subf %18, %21 : vector<128x1xf32>
    %23 = math.exp %22 : vector<128x1xf32>
    %24 = vector.broadcast %21 : vector<128x1xf32> to vector<128x128xf32>
    %25 = arith.subf %16, %24 : vector<128x128xf32>
    %26 = arith.truncf %25 : vector<128x128xf32> to vector<128x128xbf16>
    %27 = math.exp %26 : vector<128x128xbf16>
    %c0_12 = arith.constant 0 : index
    %c0_13 = arith.constant 0 : index
    %c0_14 = arith.constant 0 : index
    %28 = vector.load %arg9[%c0_12, %c0_13, %c0_14] : memref<2x128x1xf32, #tpu.memory_space<vmem>>, vector<1x128x1xf32>
    %29 = vector.shape_cast %28 : vector<1x128x1xf32> to vector<128x1xf32>
    %30 = arith.mulf %23, %29 : vector<128x1xf32>
    %31 = arith.extf %27 : vector<128x128xbf16> to vector<128x128xf32>
    %cst_15 = arith.constant dense<0.000000e+00> : vector<128xf32>
    %32 = vector.multi_reduction <add>, %31, %cst_15 [1] : vector<128x128xf32> to vector<128xf32>
    %33 = vector.shape_cast %32 : vector<128xf32> to vector<128x1xf32>
    %34 = arith.addf %30, %33 : vector<128x1xf32>
    %c0_16 = arith.constant 0 : index
    %c0_17 = arith.constant 0 : index
    %c0_18 = arith.constant 0 : index
    %35 = vector.load %arg9[%c0_16, %c0_17, %c0_18] : memref<2x128x1xf32, #tpu.memory_space<vmem>>, vector<1x128x1xf32>
    %36 = vector.shape_cast %35 : vector<1x128x1xf32> to vector<128x1xf32>
    %37 = vector.shape_cast %34 : vector<128x1xf32> to vector<1x128x1xf32>
    tpu.vector_store %arg9[%c0_16, %c0_17, %c0_18], %37 {strides = array<i32>} : memref<2x128x1xf32, #tpu.memory_space<vmem>>, vector<1x128x1xf32>,
    %c0_19 = arith.constant 0 : index
    %c0_20 = arith.constant 0 : index
    %c0_21 = arith.constant 0 : index
    %38 = vector.load %arg8[%c0_19, %c0_20, %c0_21] : memref<2x128x1xf32, #tpu.memory_space<vmem>>, vector<1x128x1xf32>
    %39 = vector.shape_cast %38 : vector<1x128x1xf32> to vector<128x1xf32>
    %40 = vector.shape_cast %21 : vector<128x1xf32> to vector<1x128x1xf32>
    tpu.vector_store %arg8[%c0_19, %c0_20, %c0_21], %40 {strides = array<i32>} : memref<2x128x1xf32, #tpu.memory_space<vmem>>, vector<1x128x1xf32>,
    %cst_22 = arith.constant dense<0.000000e+00> : vector<128x64xf32>
    %41 = tpu.matmul %27, %15, %cst_22 {dimension_numbers = #tpu.dot_dimension_numbers<[1], [0], [0], [1], [0, 0, 1, 1], [], []>} : vector<128x128xbf16>, vector<128x64xbf16>, vector<128x64xf32> -> vector<128x64xf32>
    %42 = vector.extract_strided_slice %12 {offsets = [0, 0], sizes = [128, 64], strides = [1, 1]} : vector<128x128xf32> to vector<128x64xf32>
    %43 = vector.broadcast %23 : vector<128x1xf32> to vector<128x64xf32>
    %44 = arith.mulf %43, %42 : vector<128x64xf32>
    %45 = arith.addf %44, %41 : vector<128x64xf32>
    %46 = vector.extract_strided_slice %11 {offsets = [0, 64], sizes = [128, 64], strides = [1, 1]} : vector<128x128xbf16> to vector<128x64xbf16>
    %47 = vector.extract_strided_slice %7 {offsets = [0, 64], sizes = [128, 64], strides = [1, 1]} : vector<128x128xbf16> to vector<128x64xbf16>
    %48 = vector.extract_strided_slice %10 {offsets = [0, 64], sizes = [128, 64], strides = [1, 1]} : vector<128x128xbf16> to vector<128x64xbf16>
    %cst_23 = arith.constant dense<0.000000e+00> : vector<128x128xf32>
    %49 = tpu.matmul %46, %47, %cst_23 {dimension_numbers = #tpu.dot_dimension_numbers<[1], [1], [0], [0], [0, 0, 1, 0], [], []>} : vector<128x64xbf16>, vector<128x64xbf16>, vector<128x128xf32> -> vector<128x128xf32>
    %c1 = arith.constant 1 : index
    %c0_24 = arith.constant 0 : index
    %c0_25 = arith.constant 0 : index
    %50 = vector.load %arg8[%c1, %c0_24, %c0_25] : memref<2x128x1xf32, #tpu.memory_space<vmem>>, vector<1x128x1xf32>
    %51 = vector.shape_cast %50 : vector<1x128x1xf32> to vector<128x1xf32>
    %cst_26 = arith.constant dense<0xFF800000> : vector<128xf32>
    %52 = vector.multi_reduction <maximumf>, %49, %cst_26 [1] : vector<128x128xf32> to vector<128xf32>
    %53 = vector.shape_cast %52 : vector<128xf32> to vector<128x1xf32>
    %54 = arith.maximumf %51, %53 : vector<128x1xf32>
    %55 = arith.subf %51, %54 : vector<128x1xf32>
    %56 = math.exp %55 : vector<128x1xf32>
    %57 = vector.broadcast %54 : vector<128x1xf32> to vector<128x128xf32>
    %58 = arith.subf %49, %57 : vector<128x128xf32>
    %59 = arith.truncf %58 : vector<128x128xf32> to vector<128x128xbf16>
    %60 = math.exp %59 : vector<128x128xbf16>
    %c1_27 = arith.constant 1 : index
    %c0_28 = arith.constant 0 : index
    %c0_29 = arith.constant 0 : index
    %61 = vector.load %arg9[%c1_27, %c0_28, %c0_29] : memref<2x128x1xf32, #tpu.memory_space<vmem>>, vector<1x128x1xf32>
    %62 = vector.shape_cast %61 : vector<1x128x1xf32> to vector<128x1xf32>
    %63 = arith.mulf %56, %62 : vector<128x1xf32>
    %64 = arith.extf %60 : vector<128x128xbf16> to vector<128x128xf32>
    %cst_30 = arith.constant dense<0.000000e+00> : vector<128xf32>
    %65 = vector.multi_reduction <add>, %64, %cst_30 [1] : vector<128x128xf32> to vector<128xf32>
    %66 = vector.shape_cast %65 : vector<128xf32> to vector<128x1xf32>
    %67 = arith.addf %63, %66 : vector<128x1xf32>
    %c1_31 = arith.constant 1 : index
    %c0_32 = arith.constant 0 : index
    %c0_33 = arith.constant 0 : index
    %68 = vector.load %arg9[%c1_31, %c0_32, %c0_33] : memref<2x128x1xf32, #tpu.memory_space<vmem>>, vector<1x128x1xf32>
    %69 = vector.shape_cast %68 : vector<1x128x1xf32> to vector<128x1xf32>
    %70 = vector.shape_cast %67 : vector<128x1xf32> to vector<1x128x1xf32>
    tpu.vector_store %arg9[%c1_31, %c0_32, %c0_33], %70 {strides = array<i32>} : memref<2x128x1xf32, #tpu.memory_space<vmem>>, vector<1x128x1xf32>,
    %c1_34 = arith.constant 1 : index
    %c0_35 = arith.constant 0 : index
    %c0_36 = arith.constant 0 : index
    %71 = vector.load %arg8[%c1_34, %c0_35, %c0_36] : memref<2x128x1xf32, #tpu.memory_space<vmem>>, vector<1x128x1xf32>
    %72 = vector.shape_cast %71 : vector<1x128x1xf32> to vector<128x1xf32>
    %73 = vector.shape_cast %54 : vector<128x1xf32> to vector<1x128x1xf32>
    tpu.vector_store %arg8[%c1_34, %c0_35, %c0_36], %73 {strides = array<i32>} : memref<2x128x1xf32, #tpu.memory_space<vmem>>, vector<1x128x1xf32>,
    %cst_37 = arith.constant dense<0.000000e+00> : vector<128x64xf32>
    %74 = tpu.matmul %60, %48, %cst_37 {dimension_numbers = #tpu.dot_dimension_numbers<[1], [0], [0], [1], [0, 0, 1, 1], [], []>} : vector<128x128xbf16>, vector<128x64xbf16>, vector<128x64xf32> -> vector<128x64xf32>
    %75 = vector.extract_strided_slice %12 {offsets = [0, 64], sizes = [128, 64], strides = [1, 1]} : vector<128x128xf32> to vector<128x64xf32>
    %76 = vector.broadcast %56 : vector<128x1xf32> to vector<128x64xf32>
    %77 = arith.mulf %76, %75 : vector<128x64xf32>
    %78 = arith.addf %77, %74 : vector<128x64xf32>
    %79 = tpu.concatenate %45, %78 in 1 : vector<128x64xf32>, vector<128x64xf32> -> vector<128x128xf32>
    %c0_38 = arith.constant 0 : index
    %c0_39 = arith.constant 0 : index
    %80 = vector.load %arg10[%c0_38, %c0_39] : memref<128x128xf32, #tpu.memory_space<vmem>>, vector<128x128xf32>
    tpu.vector_store %arg10[%c0_38, %c0_39], %79 {strides = array<i32>} : memref<128x128xf32, #tpu.memory_space<vmem>>, vector<128x128xf32>,
    %c1_i32 = arith.constant 1 : i32
    %81 = arith.cmpi eq, %arg2, %c1_i32 : i32
    %82 = arith.extui %81 : i1 to i32
    %c0_i32_40 = arith.constant 0 : i32
    %83 = arith.cmpi ne, %82, %c0_i32_40 : i32
    scf.if %83 {
      %c0_41 = arith.constant 0 : index
      %c0_42 = arith.constant 0 : index
      %c0_43 = arith.constant 0 : index
      %84 = vector.load %arg9[%c0_41, %c0_42, %c0_43] : memref<2x128x1xf32, #tpu.memory_space<vmem>>, vector<1x128x1xf32>
      %85 = vector.shape_cast %84 : vector<1x128x1xf32> to vector<128x1xf32>
      %86 = tpu.reciprocal %85 {approx = true} : vector<128x1xf32> -> vector<128x1xf32>
      %87 = vector.shape_cast %86 : vector<128x1xf32> to vector<128x1xf32>
      %88 = vector.broadcast %87 : vector<128x1xf32> to vector<128x64xf32>
      %c1_44 = arith.constant 1 : index
      %c0_45 = arith.constant 0 : index
      %c0_46 = arith.constant 0 : index
      %89 = vector.load %arg9[%c1_44, %c0_45, %c0_46] : memref<2x128x1xf32, #tpu.memory_space<vmem>>, vector<1x128x1xf32>
      %90 = vector.shape_cast %89 : vector<1x128x1xf32> to vector<128x1xf32>
      %91 = tpu.reciprocal %90 {approx = true} : vector<128x1xf32> -> vector<128x1xf32>
      %92 = vector.shape_cast %91 : vector<128x1xf32> to vector<128x1xf32>
      %93 = vector.broadcast %92 : vector<128x1xf32> to vector<128x64xf32>
      %c0_47 = arith.constant 0 : index
      %c0_48 = arith.constant 0 : index
      %94 = vector.load %arg10[%c0_47, %c0_48] : memref<128x128xf32, #tpu.memory_space<vmem>>, vector<128x128xf32>
      %95 = tpu.concatenate %88, %93 in 1 : vector<128x64xf32>, vector<128x64xf32> -> vector<128x128xf32>
      %96 = arith.mulf %94, %95 : vector<128x128xf32>
      %97 = arith.truncf %96 : vector<128x128xf32> to vector<128x128xbf16>
      %c0_49 = arith.constant 0 : index
      %c0_50 = arith.constant 0 : index
      %c0_51 = arith.constant 0 : index
      %98 = vector.load %arg6[%c0_49, %c0_50, %c0_51] : memref<1x128x128xbf16, #tpu.memory_space<vmem>>, vector<1x128x128xbf16>
      %99 = vector.shape_cast %98 : vector<1x128x128xbf16> to vector<128x128xbf16>
      %100 = vector.shape_cast %97 : vector<128x128xbf16> to vector<1x128x128xbf16>
      tpu.vector_store %arg6[%c0_49, %c0_50, %c0_51], %100 {strides = array<i32>} : memref<1x128x128xbf16, #tpu.memory_space<vmem>>, vector<1x128x128xbf16>,
    } else {
    }
    return
  }
  func.func @transform_0(%arg0: i32, %arg1: i32, %arg2: i32) -> (i32, i32, i32) {
    %c0_i32 = arith.constant 0 : i32
    %c0_i32_0 = arith.constant 0 : i32
    return %arg0, %arg1, %c0_i32 : i32, i32, i32
  }
  func.func @transform_1(%arg0: i32, %arg1: i32, %arg2: i32) -> (i32, i32, i32) {
    %c0_i32 = arith.constant 0 : i32
    %c0_i32_0 = arith.constant 0 : i32
    %c0_i32_1 = arith.constant 0 : i32
    return %arg0, %c0_i32, %c0_i32_0 : i32, i32, i32
  }
  func.func @transform_2(%arg0: i32, %arg1: i32, %arg2: i32) -> (i32, i32, i32) {
    %c0_i32 = arith.constant 0 : i32
    %c0_i32_0 = arith.constant 0 : i32
    %c0_i32_1 = arith.constant 0 : i32
    return %arg0, %c0_i32, %c0_i32_0 : i32, i32, i32
  }
  func.func @transform_3(%arg0: i32, %arg1: i32, %arg2: i32) -> (i32, i32, i32) {
    %c0_i32 = arith.constant 0 : i32
    %c0_i32_0 = arith.constant 0 : i32
    return %arg0, %arg1, %c0_i32 : i32, i32, i32
  }
}

</mosaic_0001>

<llo_original>
// kernel: tpu_custom_call.1
$region0: #{tpu_custom_call.1}
  #allocation0 [shape = 'u32[]', space=smem, size = 0x4, offset = 0x4, fixed_abs, tag = 'smem constant byte address 0x4 - core index']
  #allocation1 [shape = 'u32[144,128]{1,0:T(1,128)}', space=vmem, size = 0x12000, scoped, tag = 'internal scratch']
  #allocation2 [shape = 'bf16[128,128]{1,0:T(8,128)(2,1)}', space=vmem, size = 0x8000, scoped, tag = 'scratch operand']
  #allocation3 [shape = 'f32[2,128,1]{2,1,0:T(8,128)}', space=vmem, size = 0x20000, scoped, tag = 'scratch operand']
  #allocation4 [shape = 'f32[2,128,1]{2,1,0:T(8,128)}', space=vmem, size = 0x20000, scoped, tag = 'scratch operand']
  #allocation5 [shape = 'f32[128,128]{1,0:T(8,128)}', space=vmem, size = 0x10000, scoped, tag = 'scratch operand']
  %s0 = inlined_call_operand.hbm [shape: bf16[2,256,128], index: 0, kind: input, shape index: {}]
  %s1 = inlined_call_operand.hbm [shape: bf16[2,256,128], index: 1, kind: input, shape index: {}]
  %s2 = inlined_call_operand.hbm [shape: bf16[2,256,128], index: 2, kind: input, shape index: {}]
  %s3 = inlined_call_operand.hbm [shape: bf16[2,256,128], index: 3, kind: output, shape index: {}]
  %s4 = sld [smem:[#allocation0]]
  $region65: #{tpu_custom_call.1} parent=0
    _
  %s6 = ssub.s32 1, %s4
  %s7 = scalar_select 0, %s6, %s4
  $region1: #{tpu_custom_call.1} parent=0
    #allocation6 [shape = 'u8[65536]{0}', space=vmem, size = 0x10000, scoped, tag = 'input window, operand 0']
    #allocation7 [shape = 's32[2]{0}', space=sflag, size = 0x8, scoped, tag = 'scoped memory for tpu_custom_call.1']
    #allocation8 [shape = 's32[2]{0}', space=sflag, size = 0x8, scoped, tag = 'scoped memory for tpu_custom_call.1']
    #allocation9 [shape = 'u8[131072]{0}', space=vmem, size = 0x20000, scoped, tag = 'input window, operand 1']
    #allocation10 [shape = 's32[2]{0}', space=sflag, size = 0x8, scoped, tag = 'scoped memory for tpu_custom_call.1']
    #allocation11 [shape = 'u8[131072]{0}', space=vmem, size = 0x20000, scoped, tag = 'input window, operand 2']
    #allocation12 [shape = 'u8[65536]{0}', space=vmem, size = 0x10000, scoped, tag = 'output window, operand 0']
    %8 = vsyncpa [#allocation7], 0
    %s9 = scalar_lea.sflag [#allocation7], 1
    %10 = vsyncpa %s9, 0
    %11 = vsyncpa [#allocation10], 0
    %s12 = scalar_lea.sflag [#allocation10], 1
    %13 = vsyncpa %s12, 0
    %14 = vsyncpa [#allocation8], 0
    %s15 = scalar_lea.sflag [#allocation8], 1
    %16 = vsyncpa %s15, 0
    loop: start=0, step=1, limit=10
    $region2: #{tpu_custom_call.1} parent=1 // loop_pre_header
      _
    $region3: #{tpu_custom_call.1} parent=1 // loop_header
      %s18 = sphi 0, %s22
      %p19 = scmp.ge.s32.totalorder %s18, 10
      %s25 = sphi 0, %s44
      %s26 = sphi 0, %s40
      %s27 = sphi 0, %s36
      %s28 = sphi 0, %s25
      %s29 = sphi 0, %s26
      %s30 = sphi 0, %s27
      %s31 = sphi 0, %s28
      %s32 = sphi 0, %s29
      %s33 = sphi 0, %s30
      %s49 = sphi 0, %s51
      %s52 = sphi 0, %s49
      %s53 = sphi 0, %s52
      %s69 = sphi 0, %s53
      %s75 = sphi 0, %s77
      %s78 = sphi 0, %s75
      %s79 = sphi 0, %s78
      %s95 = sphi 0, %s79
      %s101 = sphi 0, %s103
      %s104 = sphi 0, %s101
      %s105 = sphi 0, %s104
      %s121 = sphi 0, %s105
      %s129 = sphi 0, %s131
      %s132 = sphi 0, %s129
      %s133 = sphi 0, %s132
      %s149 = sphi 0, %s133
    $region4: #{tpu_custom_call.1} parent=1 // loop_header_branch
      %21 = sbr.rel (%p19) target = $region8
    $region5: #{tpu_custom_call.1} parent=1 // loop_body
      %s23 = ssub.s32 %s18, 1
      %s24 = ssub.s32 %s18, 2
      %s34 = sadd.s32 1, %s27
      %p35 = scmp.ge.s32.totalorder %s34, 2
      %s36 = scalar_select %p35, 0, %s34
      %s37 = sadd.s32 1, %s26
      %s38 = scalar_select %p35, %s37, %s26
      %p39 = scmp.ge.s32.totalorder %s38, 2
      %s40 = scalar_select %p39, 0, %s38
      %s41 = sadd.s32 1, %s25
      %s42 = scalar_select %p39, %s41, %s25
      %p43 = scmp.ge.s32.totalorder %s42, 2
      %s44 = scalar_select %p43, 0, %s42
      %s45 = ssub.s32 %s25, %s44
      %s46 = ssub.s32 %s26, %s40
      %s47 = sor.u32 %s45, %s46
      %p48 = scmp.eq.s32.totalorder %s47, 0
      %s50 = sadd.s32 %s49, 1
      %s51 = scalar_select %p48, %s49, %s50
      %p54 = pneg %p48
      %p55 = scmp.eq.s32.totalorder %s18, 7
      %p56 = por %p54, %p55
      %p57 = scmp.ne.s32.totalorder %s49, %s52
      %p58 = scmp.eq.s32.totalorder %s18, 0
      %p59 = por %p57, %p58
      %p60 = scmp.ne.s32.totalorder %s49, %s52
      %p61 = scmp.eq.s32.totalorder %s23, 7
      %p62 = por %p60, %p61
      %p63 = scmp.ne.s32.totalorder %s52, %s53
      %p64 = scmp.eq.s32.totalorder %s23, 0
      %p65 = por %p63, %p64
      %p66 = scmp.ne.s32.totalorder %s52, %s53
      %p67 = scmp.eq.s32.totalorder %s24, 7
      %p68 = por %p66, %p67
      %p70 = scmp.ne.s32.totalorder %s53, %s69
      %p71 = scmp.eq.s32.totalorder %s24, 0
      %p72 = por %p70, %p71
      %s73 = ssub.s32 %s25, %s44
      %p74 = scmp.eq.s32.totalorder %s73, 0
      %s76 = sadd.s32 %s75, 1
      %s77 = scalar_select %p74, %s75, %s76
      %p80 = pneg %p74
      %p81 = scmp.eq.s32.totalorder %s18, 7
      %p82 = por %p80, %p81
      %p83 = scmp.ne.s32.totalorder %s75, %s78
      %p84 = scmp.eq.s32.totalorder %s18, 0
      %p85 = por %p83, %p84
      %p86 = scmp.ne.s32.totalorder %s75, %s78
      %p87 = scmp.eq.s32.totalorder %s23, 7
      %p88 = por %p86, %p87
      %p89 = scmp.ne.s32.totalorder %s78, %s79
      %p90 = scmp.eq.s32.totalorder %s23, 0
      %p91 = por %p89, %p90
      %p92 = scmp.ne.s32.totalorder %s78, %s79
      %p93 = scmp.eq.s32.totalorder %s24, 7
      %p94 = por %p92, %p93
      %p96 = scmp.ne.s32.totalorder %s79, %s95
      %p97 = scmp.eq.s32.totalorder %s24, 0
      %p98 = por %p96, %p97
      %s99 = ssub.s32 %s25, %s44
      %p100 = scmp.eq.s32.totalorder %s99, 0
      %s102 = sadd.s32 %s101, 1
      %s103 = scalar_select %p100, %s101, %s102
      %p106 = pneg %p100
      %p107 = scmp.eq.s32.totalorder %s18, 7
      %p108 = por %p106, %p107
      %p109 = scmp.ne.s32.totalorder %s101, %s104
      %p110 = scmp.eq.s32.totalorder %s18, 0
      %p111 = por %p109, %p110
      %p112 = scmp.ne.s32.totalorder %s101, %s104
      %p113 = scmp.eq.s32.totalorder %s23, 7
      %p114 = por %p112, %p113
      %p115 = scmp.ne.s32.totalorder %s104, %s105
      %p116 = scmp.eq.s32.totalorder %s23, 0
      %p117 = por %p115, %p116
      %p118 = scmp.ne.s32.totalorder %s104, %s105
      %p119 = scmp.eq.s32.totalorder %s24, 7
      %p120 = por %p118, %p119
      %p122 = scmp.ne.s32.totalorder %s105, %s121
      %p123 = scmp.eq.s32.totalorder %s24, 0
      %p124 = por %p122, %p123
      %s125 = ssub.s32 %s25, %s44
      %s126 = ssub.s32 %s26, %s40
      %s127 = sor.u32 %s125, %s126
      %p128 = scmp.eq.s32.totalorder %s127, 0
      %s130 = sadd.s32 %s129, 1
      %s131 = scalar_select %p128, %s129, %s130
      %p134 = pneg %p128
      %p135 = scmp.eq.s32.totalorder %s18, 7
      %p136 = por %p134, %p135
      %p137 = scmp.ne.s32.totalorder %s129, %s132
      %p138 = scmp.eq.s32.totalorder %s18, 0
      %p139 = por %p137, %p138
      %p140 = scmp.ne.s32.totalorder %s129, %s132
      %p141 = scmp.eq.s32.totalorder %s23, 7
      %p142 = por %p140, %p141
      %p143 = scmp.ne.s32.totalorder %s132, %s133
      %p144 = scmp.eq.s32.totalorder %s23, 0
      %p145 = por %p143, %p144
      %p146 = scmp.ne.s32.totalorder %s132, %s133
      %p147 = scmp.eq.s32.totalorder %s24, 7
      %p148 = por %p146, %p147
      %p150 = scmp.ne.s32.totalorder %s133, %s149
      %p151 = scmp.eq.s32.totalorder %s24, 0
      %p152 = por %p150, %p151
      %p153 = scmp.le.s32.totalorder 1, %s18
      %p154 = scmp.lt.s32.totalorder %s18, 9
      %p155 = pnand %p153, %p154
      %p156 = pneg %p155
      // Predicated region
      $region9: #{tpu_custom_call.1} parent=5 // pred_check
        _
      $region10: #{tpu_custom_call.1} parent=5 // pred_check_branch
        %158 = sbr.rel (%p155) target = $region12
      $region11: #{tpu_custom_call.1} parent=5 // pred_region
        %s159 = ssub.s32 %s18, 1
      $region12: #{tpu_custom_call.1} parent=5 // pred_fallthru
        _
      %p160 = scmp.lt.s32.totalorder %s18, 8
      // Predicated region
      $region13: #{tpu_custom_call.1} parent=5 // pred_check
        %p161 = pneg %p160
      $region14: #{tpu_custom_call.1} parent=5 // pred_check_branch
        %163 = sbr.rel (%p161) target = $region16
      $region15: #{tpu_custom_call.1} parent=5 // pred_region
        // Predicated region
        $region17: #{tpu_custom_call.1} parent=15 // pred_check
          %p164 = pneg %p59
        $region18: #{tpu_custom_call.1} parent=15 // pred_check_branch
          %166 = sbr.rel (%p164) target = $region20
        $region19: #{tpu_custom_call.1} parent=15 // pred_region
          %s167 = sand.u32 %s49, 1
          %s168 = scalar_lea.sflag [#allocation7], %s167
          %s169 = sand.u32 %s49, 1
          %s170 = smul.addr %s169, 64
          %s171 = scalar_lea.vmem [#allocation6], %s170
          %s172 = smul.u32 16, %s26
          %s174 = ssub.s32 1024, 1024
          %175 = vsyncadd %s168, %s174
          %s176 = smul.addr %s25, 32
          %s177 = sadd.s32 %s172, %s176
          %s178 = smul.addr %s177, 64
          %s179 = scalar_lea.hbm %s0, %s178
          %s180 = sshll.u32 %s171, 4
          %s181 = int_to_ptr.vmem [resolvable:$true] %s180
          %186 = dma.hbm_to_vmem [thread:$0]  %s179, 1024, %s181, %s168, 64, 64, 4
        $region20: #{tpu_custom_call.1} parent=15 // pred_fallthru
          _
        // Predicated region
        $region21: #{tpu_custom_call.1} parent=15 // pred_check
          %p187 = pneg %p85
        $region22: #{tpu_custom_call.1} parent=15 // pred_check_branch
          %189 = sbr.rel (%p187) target = $region24
        $region23: #{tpu_custom_call.1} parent=15 // pred_region
          %s190 = sand.u32 %s18, 1
          %s191 = scalar_lea.sflag [#allocation10], %s190
          %s192 = sand.u32 %s75, 1
          %s193 = smul.addr %s192, 128
          %s194 = scalar_lea.vmem [#allocation9], %s193
          %s196 = ssub.s32 2048, 2048
          %197 = vsyncadd %s191, %s196
          %s198 = smul.addr %s25, 32
          %s199 = smul.addr %s198, 64
          %s200 = scalar_lea.hbm %s1, %s199
          %s201 = sshll.u32 %s194, 4
          %s202 = int_to_ptr.vmem [resolvable:$true] %s201
          %207 = dma.hbm_to_vmem [thread:$0]  %s200, 2048, %s202, %s191, 64, 64, 4
        $region24: #{tpu_custom_call.1} parent=15 // pred_fallthru
          _
        // Predicated region
        $region25: #{tpu_custom_call.1} parent=15 // pred_check
          %p208 = pneg %p111
        $region26: #{tpu_custom_call.1} parent=15 // pred_check_branch
          %210 = sbr.rel (%p208) target = $region28
        $region27: #{tpu_custom_call.1} parent=15 // pred_region
          %s211 = sand.u32 %s18, 1
          %s212 = scalar_lea.sflag [#allocation10], %s211
          %s213 = sand.u32 %s101, 1
          %s214 = smul.addr %s213, 128
          %s215 = scalar_lea.vmem [#allocation11], %s214
          %s217 = ssub.s32 2048, 2048
          %218 = vsyncadd %s212, %s217
          %s219 = smul.addr %s25, 32
          %s220 = smul.addr %s219, 64
          %s221 = scalar_lea.hbm %s2, %s220
          %s222 = sshll.u32 %s215, 4
          %s223 = int_to_ptr.vmem [resolvable:$true] %s222
          %228 = dma.hbm_to_vmem [thread:$0]  %s221, 2048, %s223, %s212, 64, 64, 4
        $region28: #{tpu_custom_call.1} parent=15 // pred_fallthru
          _
      $region16: #{tpu_custom_call.1} parent=5 // pred_fallthru
        _
      %p229 = scmp.le.s32.totalorder 1, %s18
      %p230 = scmp.lt.s32.totalorder %s18, 9
      %p231 = pnand %p229, %p230
      %p232 = pneg %p231
      // Predicated region
      $region29: #{tpu_custom_call.1} parent=5 // pred_check
        _
      $region30: #{tpu_custom_call.1} parent=5 // pred_check_branch
        %234 = sbr.rel (%p231) target = $region32
      $region31: #{tpu_custom_call.1} parent=5 // pred_region
        %s235 = ssub.s32 %s18, 1
        %s236 = sand.u32 %s52, 1
        %s237 = scalar_lea.sflag [#allocation7], %s236
        %s238 = sand.u32 %s52, 1
        %s239 = smul.addr %s238, 64
        %s240 = scalar_lea.vmem [#allocation6], %s239
        // Predicated region
        $region33: #{tpu_custom_call.1} parent=31 // pred_check
          %p241 = pneg %p65
        $region34: #{tpu_custom_call.1} parent=31 // pred_check_branch
          %243 = sbr.rel (%p241) target = $region36
        $region35: #{tpu_custom_call.1} parent=31 // pred_region
          %244 = dma.done %s237, 1024
        $region36: #{tpu_custom_call.1} parent=31 // pred_fallthru
          _
        %s245 = sand.u32 %s23, 1
        %s246 = scalar_lea.sflag [#allocation10], %s245
        %s247 = sand.u32 %s78, 1
        %s248 = smul.addr %s247, 128
        %s249 = scalar_lea.vmem [#allocation9], %s248
        // Predicated region
        $region37: #{tpu_custom_call.1} parent=31 // pred_check
          %p250 = pneg %p91
        $region38: #{tpu_custom_call.1} parent=31 // pred_check_branch
          %252 = sbr.rel (%p250) target = $region40
        $region39: #{tpu_custom_call.1} parent=31 // pred_region
          %253 = dma.done %s246, 2048
        $region40: #{tpu_custom_call.1} parent=31 // pred_fallthru
          _
        %s254 = sand.u32 %s23, 1
        %s255 = scalar_lea.sflag [#allocation10], %s254
        %s256 = sand.u32 %s104, 1
        %s257 = smul.addr %s256, 128
        %s258 = scalar_lea.vmem [#allocation11], %s257
        // Predicated region
        $region41: #{tpu_custom_call.1} parent=31 // pred_check
          %p259 = pneg %p117
        $region42: #{tpu_custom_call.1} parent=31 // pred_check_branch
          %261 = sbr.rel (%p259) target = $region44
        $region43: #{tpu_custom_call.1} parent=31 // pred_region
          %262 = dma.done %s255, 2048
        $region44: #{tpu_custom_call.1} parent=31 // pred_fallthru
          _
        %s263 = sand.u32 %s52, 1
        %s264 = scalar_lea.sflag [#allocation7], %s263
        %s265 = sand.u32 %s52, 1
        %s266 = smul.addr %s265, 64
        %s267 = scalar_lea.vmem [#allocation6], %s266
        %p268 = pneg %p65
        %p269 = pneg %p62
        %s270 = sand.u32 %s23, 1
        %s271 = scalar_lea.sflag [#allocation10], %s270
        %s272 = sand.u32 %s78, 1
        %s273 = smul.addr %s272, 128
        %s274 = scalar_lea.vmem [#allocation9], %s273
        %p275 = pneg %p91
        %p276 = pneg %p88
        %s277 = sand.u32 %s23, 1
        %s278 = scalar_lea.sflag [#allocation10], %s277
        %s279 = sand.u32 %s104, 1
        %s280 = smul.addr %s279, 128
        %s281 = scalar_lea.vmem [#allocation11], %s280
        %p282 = pneg %p117
        %p283 = pneg %p114
        %p284 = pneg %p145
        %p285 = pneg %p142
        %s286 = sand.u32 %s132, 1
        %s287 = scalar_lea.sflag [#allocation8], %s286
        %s288 = sand.u32 %s132, 1
        %s289 = smul.addr %s288, 64
        %s290 = scalar_lea.vmem [#allocation12], %s289
        %s291 = smul.u32 16, %s29
        %s292 = smul.u32 16, %s29
        %p294 = scmp.eq.s32.totalorder %s30, 0
        // Predicated region
        $region45: #{tpu_custom_call.1} parent=31 // pred_check
          %p295 = pneg %p294
        $region46: #{tpu_custom_call.1} parent=31 // pred_check_branch
          %297 = sbr.rel (%p295) target = $region48
        $region47: #{tpu_custom_call.1} parent=31 // pred_region
          %v298 = vld [vmem:[%s240] sm:$0xf]
          %v299 = vld [vmem:[%s240 + $0x4] sm:$0xf]
          %v300 = vld [vmem:[%s240 + $0x8] sm:$0xf]
          %v301 = vld [vmem:[%s240 + $0xc] sm:$0xf]
          %v302 = vld [vmem:[%s240 + $0x10] sm:$0xf]
          %v303 = vld [vmem:[%s240 + $0x14] sm:$0xf]
          %v304 = vld [vmem:[%s240 + $0x18] sm:$0xf]
          %v305 = vld [vmem:[%s240 + $0x1c] sm:$0xf]
          %v306 = vld [vmem:[%s240 + $0x20] sm:$0xf]
          %v307 = vld [vmem:[%s240 + $0x24] sm:$0xf]
          %v308 = vld [vmem:[%s240 + $0x28] sm:$0xf]
          %v309 = vld [vmem:[%s240 + $0x2c] sm:$0xf]
          %v310 = vld [vmem:[%s240 + $0x30] sm:$0xf]
          %v311 = vld [vmem:[%s240 + $0x34] sm:$0xf]
          %v312 = vld [vmem:[%s240 + $0x38] sm:$0xf]
          %v313 = vld [vmem:[%s240 + $0x3c] sm:$0xf]
          %v314 = vunpack.c.l.bf16 %v298
          %v315 = vunpack.c.l.bf16 %v299
          %v316 = vunpack.c.l.bf16 %v300
          %v317 = vunpack.c.l.bf16 %v301
          %v318 = vunpack.c.l.bf16 %v302
          %v319 = vunpack.c.l.bf16 %v303
          %v320 = vunpack.c.l.bf16 %v304
          %v321 = vunpack.c.l.bf16 %v305
          %v322 = vunpack.c.l.bf16 %v306
          %v323 = vunpack.c.l.bf16 %v307
          %v324 = vunpack.c.l.bf16 %v308
          %v325 = vunpack.c.l.bf16 %v309
          %v326 = vunpack.c.l.bf16 %v310
          %v327 = vunpack.c.l.bf16 %v311
          %v328 = vunpack.c.l.bf16 %v312
          %v329 = vunpack.c.l.bf16 %v313
          %v330 = vmul.f32 %v314, 0.125
          %v331 = vmul.f32 %v315, 0.125
          %v332 = vmul.f32 %v316, 0.125
          %v333 = vmul.f32 %v317, 0.125
          %v334 = vmul.f32 %v318, 0.125
          %v335 = vmul.f32 %v319, 0.125
          %v336 = vmul.f32 %v320, 0.125
          %v337 = vmul.f32 %v321, 0.125
          %v338 = vmul.f32 %v322, 0.125
          %v339 = vmul.f32 %v323, 0.125
          %v340 = vmul.f32 %v324, 0.125
          %v341 = vmul.f32 %v325, 0.125
          %v342 = vmul.f32 %v326, 0.125
          %v343 = vmul.f32 %v327, 0.125
          %v344 = vmul.f32 %v328, 0.125
          %v345 = vmul.f32 %v329, 0.125
          %v346 = vpack.c.bf16 %v331, %v330
          %v347 = vpack.c.bf16 %v333, %v332
          %v348 = vpack.c.bf16 %v335, %v334
          %v349 = vpack.c.bf16 %v337, %v336
          %v350 = vpack.c.bf16 %v339, %v338
          %v351 = vpack.c.bf16 %v341, %v340
          %v352 = vpack.c.bf16 %v343, %v342
          %v353 = vpack.c.bf16 %v345, %v344
          %v362 = vunpack.c.l.b16 %v346
          %v363 = vunpack.c.h.b16 %v346
          %v364 = vunpack.c.l.b16 %v347
          %v365 = vunpack.c.h.b16 %v347
          %v366 = vunpack.c.l.b16 %v348
          %v367 = vunpack.c.h.b16 %v348
          %v368 = vunpack.c.l.b16 %v349
          %v369 = vunpack.c.h.b16 %v349
          %v370 = vunpack.c.l.b16 %v350
          %v371 = vunpack.c.h.b16 %v350
          %v372 = vunpack.c.l.b16 %v351
          %v373 = vunpack.c.h.b16 %v351
          %v374 = vunpack.c.l.b16 %v352
          %v375 = vunpack.c.h.b16 %v352
          %v376 = vunpack.c.l.b16 %v353
          %v377 = vunpack.c.h.b16 %v353
          %v378 = vpack.c.b16 %v362, %v362
          %v379 = vpack.c.b16 %v363, %v363
          %v380 = vpack.c.b16 %v364, %v364
          %v381 = vpack.c.b16 %v365, %v365
          %v382 = vpack.c.b16 %v366, %v366
          %v383 = vpack.c.b16 %v367, %v367
          %v384 = vpack.c.b16 %v368, %v368
          %v385 = vpack.c.b16 %v369, %v369
          %v386 = vpack.c.b16 %v370, %v370
          %v387 = vpack.c.b16 %v371, %v371
          %v388 = vpack.c.b16 %v372, %v372
          %v389 = vpack.c.b16 %v373, %v373
          %v390 = vpack.c.b16 %v374, %v374
          %v391 = vpack.c.b16 %v375, %v375
          %v392 = vpack.c.b16 %v376, %v376
          %v393 = vpack.c.b16 %v377, %v377
          %410 = vst [vmem:[#allocation2] sm:$0xf] %v378
          %411 = vst [vmem:[#allocation2 + $0x4] sm:$0xf] %v379
          %412 = vst [vmem:[#allocation2 + $0x8] sm:$0xf] %v380
          %413 = vst [vmem:[#allocation2 + $0xc] sm:$0xf] %v381
          %414 = vst [vmem:[#allocation2 + $0x10] sm:$0xf] %v382
          %415 = vst [vmem:[#allocation2 + $0x14] sm:$0xf] %v383
          %416 = vst [vmem:[#allocation2 + $0x18] sm:$0xf] %v384
          %417 = vst [vmem:[#allocation2 + $0x1c] sm:$0xf] %v385
          %418 = vst [vmem:[#allocation2 + $0x20] sm:$0xf] %v386
          %419 = vst [vmem:[#allocation2 + $0x24] sm:$0xf] %v387
          %420 = vst [vmem:[#allocation2 + $0x28] sm:$0xf] %v388
          %421 = vst [vmem:[#allocation2 + $0x2c] sm:$0xf] %v389
          %422 = vst [vmem:[#allocation2 + $0x30] sm:$0xf] %v390
          %423 = vst [vmem:[#allocation2 + $0x34] sm:$0xf] %v391
          %424 = vst [vmem:[#allocation2 + $0x38] sm:$0xf] %v392
          %425 = vst [vmem:[#allocation2 + $0x3c] sm:$0xf] %v393
          %vm426 = vcmask 7168
          %427 = vst.msk [vmem:[#allocation3] sm:$0xff] %vm426, -inf
          %428 = vst.msk [vmem:[#allocation3 + $0x8] sm:$0xff] %vm426, -inf
          %429 = vst.msk [vmem:[#allocation3 + $0x10] sm:$0xff] %vm426, -inf
          %430 = vst.msk [vmem:[#allocation3 + $0x18] sm:$0xff] %vm426, -inf
          %431 = vst.msk [vmem:[#allocation3 + $0x20] sm:$0xff] %vm426, -inf
          %432 = vst.msk [vmem:[#allocation3 + $0x28] sm:$0xff] %vm426, -inf
          %433 = vst.msk [vmem:[#allocation3 + $0x30] sm:$0xff] %vm426, -inf
          %434 = vst.msk [vmem:[#allocation3 + $0x38] sm:$0xff] %vm426, -inf
          %435 = vst.msk [vmem:[#allocation3 + $0x40] sm:$0xff] %vm426, -inf
          %436 = vst.msk [vmem:[#allocation3 + $0x48] sm:$0xff] %vm426, -inf
          %437 = vst.msk [vmem:[#allocation3 + $0x50] sm:$0xff] %vm426, -inf
          %438 = vst.msk [vmem:[#allocation3 + $0x58] sm:$0xff] %vm426, -inf
          %439 = vst.msk [vmem:[#allocation3 + $0x60] sm:$0xff] %vm426, -inf
          %440 = vst.msk [vmem:[#allocation3 + $0x68] sm:$0xff] %vm426, -inf
          %441 = vst.msk [vmem:[#allocation3 + $0x70] sm:$0xff] %vm426, -inf
          %442 = vst.msk [vmem:[#allocation3 + $0x78] sm:$0xff] %vm426, -inf
          %443 = vst.msk [vmem:[#allocation3 + $0x80] sm:$0xff] %vm426, -inf
          %444 = vst.msk [vmem:[#allocation3 + $0x88] sm:$0xff] %vm426, -inf
          %445 = vst.msk [vmem:[#allocation3 + $0x90] sm:$0xff] %vm426, -inf
          %446 = vst.msk [vmem:[#allocation3 + $0x98] sm:$0xff] %vm426, -inf
          %447 = vst.msk [vmem:[#allocation3 + $0xa0] sm:$0xff] %vm426, -inf
          %448 = vst.msk [vmem:[#allocation3 + $0xa8] sm:$0xff] %vm426, -inf
          %449 = vst.msk [vmem:[#allocation3 + $0xb0] sm:$0xff] %vm426, -inf
          %450 = vst.msk [vmem:[#allocation3 + $0xb8] sm:$0xff] %vm426, -inf
          %451 = vst.msk [vmem:[#allocation3 + $0xc0] sm:$0xff] %vm426, -inf
          %452 = vst.msk [vmem:[#allocation3 + $0xc8] sm:$0xff] %vm426, -inf
          %453 = vst.msk [vmem:[#allocation3 + $0xd0] sm:$0xff] %vm426, -inf
          %454 = vst.msk [vmem:[#allocation3 + $0xd8] sm:$0xff] %vm426, -inf
          %455 = vst.msk [vmem:[#allocation3 + $0xe0] sm:$0xff] %vm426, -inf
          %456 = vst.msk [vmem:[#allocation3 + $0xe8] sm:$0xff] %vm426, -inf
          %457 = vst.msk [vmem:[#allocation3 + $0xf0] sm:$0xff] %vm426, -inf
          %458 = vst.msk [vmem:[#allocation3 + $0xf8] sm:$0xff] %vm426, -inf
          %459 = vst.msk [vmem:[#allocation4] sm:$0xff] %vm426, 0.0
          %460 = vst.msk [vmem:[#allocation4 + $0x8] sm:$0xff] %vm426, 0.0
          %461 = vst.msk [vmem:[#allocation4 + $0x10] sm:$0xff] %vm426, 0.0
          %462 = vst.msk [vmem:[#allocation4 + $0x18] sm:$0xff] %vm426, 0.0
          %463 = vst.msk [vmem:[#allocation4 + $0x20] sm:$0xff] %vm426, 0.0
          %464 = vst.msk [vmem:[#allocation4 + $0x28] sm:$0xff] %vm426, 0.0
          %465 = vst.msk [vmem:[#allocation4 + $0x30] sm:$0xff] %vm426, 0.0
          %466 = vst.msk [vmem:[#allocation4 + $0x38] sm:$0xff] %vm426, 0.0
          %467 = vst.msk [vmem:[#allocation4 + $0x40] sm:$0xff] %vm426, 0.0
          %468 = vst.msk [vmem:[#allocation4 + $0x48] sm:$0xff] %vm426, 0.0
          %469 = vst.msk [vmem:[#allocation4 + $0x50] sm:$0xff] %vm426, 0.0
          %470 = vst.msk [vmem:[#allocation4 + $0x58] sm:$0xff] %vm426, 0.0
          %471 = vst.msk [vmem:[#allocation4 + $0x60] sm:$0xff] %vm426, 0.0
          %472 = vst.msk [vmem:[#allocation4 + $0x68] sm:$0xff] %vm426, 0.0
          %473 = vst.msk [vmem:[#allocation4 + $0x70] sm:$0xff] %vm426, 0.0
          %474 = vst.msk [vmem:[#allocation4 + $0x78] sm:$0xff] %vm426, 0.0
          %475 = vst.msk [vmem:[#allocation4 + $0x80] sm:$0xff] %vm426, 0.0
          %476 = vst.msk [vmem:[#allocation4 + $0x88] sm:$0xff] %vm426, 0.0
          %477 = vst.msk [vmem:[#allocation4 + $0x90] sm:$0xff] %vm426, 0.0
          %478 = vst.msk [vmem:[#allocation4 + $0x98] sm:$0xff] %vm426, 0.0
          %479 = vst.msk [vmem:[#allocation4 + $0xa0] sm:$0xff] %vm426, 0.0
          %480 = vst.msk [vmem:[#allocation4 + $0xa8] sm:$0xff] %vm426, 0.0
          %481 = vst.msk [vmem:[#allocation4 + $0xb0] sm:$0xff] %vm426, 0.0
          %482 = vst.msk [vmem:[#allocation4 + $0xb8] sm:$0xff] %vm426, 0.0
          %483 = vst.msk [vmem:[#allocation4 + $0xc0] sm:$0xff] %vm426, 0.0
          %484 = vst.msk [vmem:[#allocation4 + $0xc8] sm:$0xff] %vm426, 0.0
          %485 = vst.msk [vmem:[#allocation4 + $0xd0] sm:$0xff] %vm426, 0.0
          %486 = vst.msk [vmem:[#allocation4 + $0xd8] sm:$0xff] %vm426, 0.0
          %487 = vst.msk [vmem:[#allocation4 + $0xe0] sm:$0xff] %vm426, 0.0
          %488 = vst.msk [vmem:[#allocation4 + $0xe8] sm:$0xff] %vm426, 0.0
          %489 = vst.msk [vmem:[#allocation4 + $0xf0] sm:$0xff] %vm426, 0.0
          %490 = vst.msk [vmem:[#allocation4 + $0xf8] sm:$0xff] %vm426, 0.0
          %491 = vst [vmem:[#allocation5] sm:$0xff] 0.0
          %492 = vst [vmem:[#allocation5 + $0x8] sm:$0xff] 0.0
          %493 = vst [vmem:[#allocation5 + $0x10] sm:$0xff] 0.0
          %494 = vst [vmem:[#allocation5 + $0x18] sm:$0xff] 0.0
          %495 = vst [vmem:[#allocation5 + $0x20] sm:$0xff] 0.0
          %496 = vst [vmem:[#allocation5 + $0x28] sm:$0xff] 0.0
          %497 = vst [vmem:[#allocation5 + $0x30] sm:$0xff] 0.0
          %498 = vst [vmem:[#allocation5 + $0x38] sm:$0xff] 0.0
          %499 = vst [vmem:[#allocation5 + $0x40] sm:$0xff] 0.0
          %500 = vst [vmem:[#allocation5 + $0x48] sm:$0xff] 0.0
          %501 = vst [vmem:[#allocation5 + $0x50] sm:$0xff] 0.0
          %502 = vst [vmem:[#allocation5 + $0x58] sm:$0xff] 0.0
          %503 = vst [vmem:[#allocation5 + $0x60] sm:$0xff] 0.0
          %504 = vst [vmem:[#allocation5 + $0x68] sm:$0xff] 0.0
          %505 = vst [vmem:[#allocation5 + $0x70] sm:$0xff] 0.0
          %506 = vst [vmem:[#allocation5 + $0x78] sm:$0xff] 0.0
        $region48: #{tpu_custom_call.1} parent=31 // pred_fallthru
          _
        %s507 = smul.u32 %s30, 128
        %s508 = sshra.s32 %s507, 3
        %s509 = sand.u32 %s507, 7
        %s510 = smul.addr %s508, 4
        %s511 = scalar_lea.vmem %s249, %s510 [#allocation9]
        %v512 = vld [vmem:[%s511] sm:$0xf]
        %v513 = vld [vmem:[%s511 + $0x4] sm:$0xf]
        %v514 = vld [vmem:[%s511 + $0x8] sm:$0xf]
        %v515 = vld [vmem:[%s511 + $0xc] sm:$0xf]
        %v516 = vld [vmem:[%s511 + $0x10] sm:$0xf]
        %v517 = vld [vmem:[%s511 + $0x14] sm:$0xf]
        %v518 = vld [vmem:[%s511 + $0x18] sm:$0xf]
        %v519 = vld [vmem:[%s511 + $0x1c] sm:$0xf]
        %v520 = vld [vmem:[%s511 + $0x20] sm:$0xf]
        %v521 = vld [vmem:[%s511 + $0x24] sm:$0xf]
        %v522 = vld [vmem:[%s511 + $0x28] sm:$0xf]
        %v523 = vld [vmem:[%s511 + $0x2c] sm:$0xf]
        %v524 = vld [vmem:[%s511 + $0x30] sm:$0xf]
        %v525 = vld [vmem:[%s511 + $0x34] sm:$0xf]
        %v526 = vld [vmem:[%s511 + $0x38] sm:$0xf]
        %v527 = vld [vmem:[%s511 + $0x3c] sm:$0xf]
        %s528 = smul.addr %s508, 4
        %s529 = scalar_lea.vmem %s258, %s528 [#allocation11]
        %v530 = vld [vmem:[%s529] sm:$0xf]
        %v531 = vld [vmem:[%s529 + $0x4] sm:$0xf]
        %v532 = vld [vmem:[%s529 + $0x8] sm:$0xf]
        %v533 = vld [vmem:[%s529 + $0xc] sm:$0xf]
        %v534 = vld [vmem:[%s529 + $0x10] sm:$0xf]
        %v535 = vld [vmem:[%s529 + $0x14] sm:$0xf]
        %v536 = vld [vmem:[%s529 + $0x18] sm:$0xf]
        %v537 = vld [vmem:[%s529 + $0x1c] sm:$0xf]
        %v538 = vld [vmem:[%s529 + $0x20] sm:$0xf]
        %v539 = vld [vmem:[%s529 + $0x24] sm:$0xf]
        %v540 = vld [vmem:[%s529 + $0x28] sm:$0xf]
        %v541 = vld [vmem:[%s529 + $0x2c] sm:$0xf]
        %v542 = vld [vmem:[%s529 + $0x30] sm:$0xf]
        %v543 = vld [vmem:[%s529 + $0x34] sm:$0xf]
        %v544 = vld [vmem:[%s529 + $0x38] sm:$0xf]
        %v545 = vld [vmem:[%s529 + $0x3c] sm:$0xf]
        %v546 = vld [vmem:[#allocation2] sm:$0xf]
        %v547 = vld [vmem:[#allocation2 + $0x4] sm:$0xf]
        %v548 = vld [vmem:[#allocation2 + $0x8] sm:$0xf]
        %v549 = vld [vmem:[#allocation2 + $0xc] sm:$0xf]
        %v550 = vld [vmem:[#allocation2 + $0x10] sm:$0xf]
        %v551 = vld [vmem:[#allocation2 + $0x14] sm:$0xf]
        %v552 = vld [vmem:[#allocation2 + $0x18] sm:$0xf]
        %v553 = vld [vmem:[#allocation2 + $0x1c] sm:$0xf]
        %v554 = vld [vmem:[#allocation2 + $0x20] sm:$0xf]
        %v555 = vld [vmem:[#allocation2 + $0x24] sm:$0xf]
        %v556 = vld [vmem:[#allocation2 + $0x28] sm:$0xf]
        %v557 = vld [vmem:[#allocation2 + $0x2c] sm:$0xf]
        %v558 = vld [vmem:[#allocation2 + $0x30] sm:$0xf]
        %v559 = vld [vmem:[#allocation2 + $0x34] sm:$0xf]
        %v560 = vld [vmem:[#allocation2 + $0x38] sm:$0xf]
        %v561 = vld [vmem:[#allocation2 + $0x3c] sm:$0xf]
        %v562 = vld [vmem:[#allocation5] sm:$0xff]
        %v563 = vld [vmem:[#allocation5 + $0x8] sm:$0xff]
        %v564 = vld [vmem:[#allocation5 + $0x10] sm:$0xff]
        %v565 = vld [vmem:[#allocation5 + $0x18] sm:$0xff]
        %v566 = vld [vmem:[#allocation5 + $0x20] sm:$0xff]
        %v567 = vld [vmem:[#allocation5 + $0x28] sm:$0xff]
        %v568 = vld [vmem:[#allocation5 + $0x30] sm:$0xff]
        %v569 = vld [vmem:[#allocation5 + $0x38] sm:$0xff]
        %v570 = vld [vmem:[#allocation5 + $0x40] sm:$0xff]
        %v571 = vld [vmem:[#allocation5 + $0x48] sm:$0xff]
        %v572 = vld [vmem:[#allocation5 + $0x50] sm:$0xff]
        %v573 = vld [vmem:[#allocation5 + $0x58] sm:$0xff]
        %v574 = vld [vmem:[#allocation5 + $0x60] sm:$0xff]
        %v575 = vld [vmem:[#allocation5 + $0x68] sm:$0xff]
        %v576 = vld [vmem:[#allocation5 + $0x70] sm:$0xff]
        %v577 = vld [vmem:[#allocation5 + $0x78] sm:$0xff]
        %v594 = vunpack.c.l.b16 %v546
        %v595 = vunpack.c.l.b16 %v547
        %v596 = vunpack.c.l.b16 %v548
        %v597 = vunpack.c.l.b16 %v549
        %v598 = vunpack.c.l.b16 %v550
        %v599 = vunpack.c.l.b16 %v551
        %v600 = vunpack.c.l.b16 %v552
        %v601 = vunpack.c.l.b16 %v553
        %v602 = vunpack.c.l.b16 %v554
        %v603 = vunpack.c.l.b16 %v555
        %v604 = vunpack.c.l.b16 %v556
        %v605 = vunpack.c.l.b16 %v557
        %v606 = vunpack.c.l.b16 %v558
        %v607 = vunpack.c.l.b16 %v559
        %v608 = vunpack.c.l.b16 %v560
        %v609 = vunpack.c.l.b16 %v561
        %v610 = vpack.c.b16 %v595, %v594
        %v611 = vpack.c.b16 %v597, %v596
        %v612 = vpack.c.b16 %v599, %v598
        %v613 = vpack.c.b16 %v601, %v600
        %v614 = vpack.c.b16 %v603, %v602
        %v615 = vpack.c.b16 %v605, %v604
        %v616 = vpack.c.b16 %v607, %v606
        %v617 = vpack.c.b16 %v609, %v608
        %v634 = vunpack.c.l.b16 %v512
        %v635 = vunpack.c.l.b16 %v513
        %v636 = vunpack.c.l.b16 %v514
        %v637 = vunpack.c.l.b16 %v515
        %v638 = vunpack.c.l.b16 %v516
        %v639 = vunpack.c.l.b16 %v517
        %v640 = vunpack.c.l.b16 %v518
        %v641 = vunpack.c.l.b16 %v519
        %v642 = vunpack.c.l.b16 %v520
        %v643 = vunpack.c.l.b16 %v521
        %v644 = vunpack.c.l.b16 %v522
        %v645 = vunpack.c.l.b16 %v523
        %v646 = vunpack.c.l.b16 %v524
        %v647 = vunpack.c.l.b16 %v525
        %v648 = vunpack.c.l.b16 %v526
        %v649 = vunpack.c.l.b16 %v527
        %v650 = vpack.c.b16 %v635, %v634
        %v651 = vpack.c.b16 %v637, %v636
        %v652 = vpack.c.b16 %v639, %v638
        %v653 = vpack.c.b16 %v641, %v640
        %v654 = vpack.c.b16 %v643, %v642
        %v655 = vpack.c.b16 %v645, %v644
        %v656 = vpack.c.b16 %v647, %v646
        %v657 = vpack.c.b16 %v649, %v648
        %vm658 = vcmask 523264
        %v660 = vsel %vm658, %v610, 0
        %v663 = vsel %vm658, %v611, 0
        %v666 = vsel %vm658, %v612, 0
        %v669 = vsel %vm658, %v613, 0
        %v672 = vsel %vm658, %v614, 0
        %v675 = vsel %vm658, %v615, 0
        %v678 = vsel %vm658, %v616, 0
        %v681 = vsel %vm658, %v617, 0
        %v684 = vsel %vm658, %v650, 0
        %v687 = vsel %vm658, %v651, 0
        %v690 = vsel %vm658, %v652, 0
        %v693 = vsel %vm658, %v653, 0
        %v696 = vsel %vm658, %v654, 0
        %v699 = vsel %vm658, %v655, 0
        %v702 = vsel %vm658, %v656, 0
        %v705 = vsel %vm658, %v657, 0
        %707 = vmatprep.subr.bf16.mxu0 0
        %708 = vmatpush1.bf16.xpose.msra.mxu0 %v705
        %709 = vmatprep.subr.bf16.mxu0 0
        %710 = vmatpush1.bf16.xpose.msra.mxu0 %v702
        %711 = vmatprep.subr.bf16.mxu0 0
        %712 = vmatpush1.bf16.xpose.msra.mxu0 %v699
        %713 = vmatprep.subr.bf16.mxu0 0
        %714 = vmatpush1.bf16.xpose.msra.mxu0 %v696
        %715 = vmatprep.subr.bf16.mxu0 0
        %716 = vmatpush1.bf16.xpose.msra.mxu0 %v693
        %717 = vmatprep.subr.bf16.mxu0 0
        %718 = vmatpush1.bf16.xpose.msra.mxu0 %v690
        %719 = vmatprep.subr.bf16.mxu0 0
        %720 = vmatpush1.bf16.xpose.msra.mxu0 %v687
        %721 = vmatprep.subr.bf16.mxu0 0
        %722 = vmatpush1.bf16.xpose.msra.mxu0 %v684
        %723 = vmatprep.subr.bf16.mxu0 0
        %724 = vmatpush2.bf16.xpose.msra.mxu0 0
        %725 = vmatprep.subr.bf16.mxu0 0
        %726 = vmatpush2.bf16.xpose.msra.mxu0 0
        %727 = vmatprep.subr.bf16.mxu0 0
        %728 = vmatpush2.bf16.xpose.msra.mxu0 0
        %729 = vmatprep.subr.bf16.mxu0 0
        %730 = vmatpush2.bf16.xpose.msra.mxu0 0
        %731 = vmatprep.subr.bf16.mxu0 0
        %732 = vmatpush2.bf16.xpose.msra.mxu0 0
        %733 = vmatprep.subr.bf16.mxu0 0
        %734 = vmatpush2.bf16.xpose.msra.mxu0 0
        %735 = vmatprep.subr.bf16.mxu0 0
        %736 = vmatpush2.bf16.xpose.msra.mxu0 0
        %737 = vmatprep.subr.bf16.mxu0 0
        %738 = vmatpush2.bf16.xpose.msra.mxu0 0
        %739 = vmatprep.mubr.bf16.mxu0 0
        %740 = vmatmul.mubr.bf16.gmra.mxu0 %v660
        %v741 = vpop.f32.mrf.mxu0
        %v742 = vadd.f32 0.0, %v741
        %v743 = vpop.f32.mrf.mxu0
        %v744 = vpop.f32.mrf.mxu0
        %v745 = vadd.f32 0.0, %v744
        %v746 = vpop.f32.mrf.mxu0
        %747 = vmatprep.mubr.bf16.mxu0 0
        %748 = vmatmul.mubr.bf16.gmra.mxu0 %v663
        %v749 = vpop.f32.mrf.mxu0
        %v750 = vadd.f32 0.0, %v749
        %v751 = vpop.f32.mrf.mxu0
        %v752 = vpop.f32.mrf.mxu0
        %v753 = vadd.f32 0.0, %v752
        %v754 = vpop.f32.mrf.mxu0
        %755 = vmatprep.mubr.bf16.mxu0 0
        %756 = vmatmul.mubr.bf16.gmra.mxu0 %v666
        %v757 = vpop.f32.mrf.mxu0
        %v758 = vadd.f32 0.0, %v757
        %v759 = vpop.f32.mrf.mxu0
        %v760 = vpop.f32.mrf.mxu0
        %v761 = vadd.f32 0.0, %v760
        %v762 = vpop.f32.mrf.mxu0
        %763 = vmatprep.mubr.bf16.mxu0 0
        %764 = vmatmul.mubr.bf16.gmra.mxu0 %v669
        %v765 = vpop.f32.mrf.mxu0
        %v766 = vadd.f32 0.0, %v765
        %v767 = vpop.f32.mrf.mxu0
        %v768 = vpop.f32.mrf.mxu0
        %v769 = vadd.f32 0.0, %v768
        %v770 = vpop.f32.mrf.mxu0
        %771 = vmatprep.mubr.bf16.mxu0 0
        %772 = vmatmul.mubr.bf16.gmra.mxu0 %v672
        %v773 = vpop.f32.mrf.mxu0
        %v774 = vadd.f32 0.0, %v773
        %v775 = vpop.f32.mrf.mxu0
        %v776 = vpop.f32.mrf.mxu0
        %v777 = vadd.f32 0.0, %v776
        %v778 = vpop.f32.mrf.mxu0
        %779 = vmatprep.mubr.bf16.mxu0 0
        %780 = vmatmul.mubr.bf16.gmra.mxu0 %v675
        %v781 = vpop.f32.mrf.mxu0
        %v782 = vadd.f32 0.0, %v781
        %v783 = vpop.f32.mrf.mxu0
        %v784 = vpop.f32.mrf.mxu0
        %v785 = vadd.f32 0.0, %v784
        %v786 = vpop.f32.mrf.mxu0
        %787 = vmatprep.mubr.bf16.mxu0 0
        %788 = vmatmul.mubr.bf16.gmra.mxu0 %v678
        %v789 = vpop.f32.mrf.mxu0
        %v790 = vadd.f32 0.0, %v789
        %v791 = vpop.f32.mrf.mxu0
        %v792 = vpop.f32.mrf.mxu0
        %v793 = vadd.f32 0.0, %v792
        %v794 = vpop.f32.mrf.mxu0
        %795 = vmatprep.mubr.bf16.mxu0 0
        %796 = vmatmul.mubr.bf16.gmra.mxu0 %v681
        %v797 = vpop.f32.mrf.mxu0
        %v798 = vadd.f32 0.0, %v797
        %v799 = vpop.f32.mrf.mxu0
        %v800 = vpop.f32.mrf.mxu0
        %v801 = vadd.f32 0.0, %v800
        %v802 = vpop.f32.mrf.mxu0
        %803 = vdwg.mxu0
        %v804 = vld [vmem:[#allocation3] sm:$0xff]
        %v805 = vld [vmem:[#allocation3 + $0x8] sm:$0xff]
        %v806 = vld [vmem:[#allocation3 + $0x10] sm:$0xff]
        %v807 = vld [vmem:[#allocation3 + $0x18] sm:$0xff]
        %v808 = vld [vmem:[#allocation3 + $0x20] sm:$0xff]
        %v809 = vld [vmem:[#allocation3 + $0x28] sm:$0xff]
        %v810 = vld [vmem:[#allocation3 + $0x30] sm:$0xff]
        %v811 = vld [vmem:[#allocation3 + $0x38] sm:$0xff]
        %v812 = vld [vmem:[#allocation3 + $0x40] sm:$0xff]
        %v813 = vld [vmem:[#allocation3 + $0x48] sm:$0xff]
        %v814 = vld [vmem:[#allocation3 + $0x50] sm:$0xff]
        %v815 = vld [vmem:[#allocation3 + $0x58] sm:$0xff]
        %v816 = vld [vmem:[#allocation3 + $0x60] sm:$0xff]
        %v817 = vld [vmem:[#allocation3 + $0x68] sm:$0xff]
        %v818 = vld [vmem:[#allocation3 + $0x70] sm:$0xff]
        %v819 = vld [vmem:[#allocation3 + $0x78] sm:$0xff]
        %820 = vmax.xlane.f32.xlu0 %v742
        %v821 = vpop.xlane.xlu0 %820
        %822 = vmax.xlane.f32.xlu0 %v745
        %v823 = vpop.xlane.xlu0 %822
        %824 = vmax.xlane.f32.xlu0 %v750
        %v825 = vpop.xlane.xlu0 %824
        %826 = vmax.xlane.f32.xlu0 %v753
        %v827 = vpop.xlane.xlu0 %826
        %828 = vmax.xlane.f32.xlu0 %v758
        %v829 = vpop.xlane.xlu0 %828
        %830 = vmax.xlane.f32.xlu0 %v761
        %v831 = vpop.xlane.xlu0 %830
        %832 = vmax.xlane.f32.xlu0 %v766
        %v833 = vpop.xlane.xlu0 %832
        %834 = vmax.xlane.f32.xlu0 %v769
        %v835 = vpop.xlane.xlu0 %834
        %836 = vmax.xlane.f32.xlu0 %v774
        %v837 = vpop.xlane.xlu0 %836
        %838 = vmax.xlane.f32.xlu0 %v777
        %v839 = vpop.xlane.xlu0 %838
        %840 = vmax.xlane.f32.xlu0 %v782
        %v841 = vpop.xlane.xlu0 %840
        %842 = vmax.xlane.f32.xlu0 %v785
        %v843 = vpop.xlane.xlu0 %842
        %844 = vmax.xlane.f32.xlu0 %v790
        %v845 = vpop.xlane.xlu0 %844
        %846 = vmax.xlane.f32.xlu0 %v793
        %v847 = vpop.xlane.xlu0 %846
        %848 = vmax.xlane.f32.xlu0 %v798
        %v849 = vpop.xlane.xlu0 %848
        %850 = vmax.xlane.f32.xlu0 %v801
        %v851 = vpop.xlane.xlu0 %850
        %v852 = vmax.f32 %v804, %v821
        %v853 = vmax.f32 %v805, %v823
        %v854 = vmax.f32 %v806, %v825
        %v855 = vmax.f32 %v807, %v827
        %v856 = vmax.f32 %v808, %v829
        %v857 = vmax.f32 %v809, %v831
        %v858 = vmax.f32 %v810, %v833
        %v859 = vmax.f32 %v811, %v835
        %v860 = vmax.f32 %v812, %v837
        %v861 = vmax.f32 %v813, %v839
        %v862 = vmax.f32 %v814, %v841
        %v863 = vmax.f32 %v815, %v843
        %v864 = vmax.f32 %v816, %v845
        %v865 = vmax.f32 %v817, %v847
        %v866 = vmax.f32 %v818, %v849
        %v867 = vmax.f32 %v819, %v851
        %v868 = vsub.f32 %v804, %v852
        %v869 = vsub.f32 %v805, %v853
        %v870 = vsub.f32 %v806, %v854
        %v871 = vsub.f32 %v807, %v855
        %v872 = vsub.f32 %v808, %v856
        %v873 = vsub.f32 %v809, %v857
        %v874 = vsub.f32 %v810, %v858
        %v875 = vsub.f32 %v811, %v859
        %v876 = vsub.f32 %v812, %v860
        %v877 = vsub.f32 %v813, %v861
        %v878 = vsub.f32 %v814, %v862
        %v879 = vsub.f32 %v815, %v863
        %v880 = vsub.f32 %v816, %v864
        %v881 = vsub.f32 %v817, %v865
        %v882 = vsub.f32 %v818, %v866
        %v883 = vsub.f32 %v819, %v867
        %v884 = vmul.f32 %v868, 1.442695
        %v885 = vpow.pop %v884
        %v886 = vmul.f32 %v869, 1.442695
        %v887 = vpow.pop %v886
        %v888 = vmul.f32 %v870, 1.442695
        %v889 = vpow.pop %v888
        %v890 = vmul.f32 %v871, 1.442695
        %v891 = vpow.pop %v890
        %v892 = vmul.f32 %v872, 1.442695
        %v893 = vpow.pop %v892
        %v894 = vmul.f32 %v873, 1.442695
        %v895 = vpow.pop %v894
        %v896 = vmul.f32 %v874, 1.442695
        %v897 = vpow.pop %v896
        %v898 = vmul.f32 %v875, 1.442695
        %v899 = vpow.pop %v898
        %v900 = vmul.f32 %v876, 1.442695
        %v901 = vpow.pop %v900
        %v902 = vmul.f32 %v877, 1.442695
        %v903 = vpow.pop %v902
        %v904 = vmul.f32 %v878, 1.442695
        %v905 = vpow.pop %v904
        %v906 = vmul.f32 %v879, 1.442695
        %v907 = vpow.pop %v906
        %v908 = vmul.f32 %v880, 1.442695
        %v909 = vpow.pop %v908
        %v910 = vmul.f32 %v881, 1.442695
        %v911 = vpow.pop %v910
        %v912 = vmul.f32 %v882, 1.442695
        %v913 = vpow.pop %v912
        %v914 = vmul.f32 %v883, 1.442695
        %v915 = vpow.pop %v914
        %917 = vset.pattern.permute.xlu0 0
        %918 = vperm.xlu0 %917, %v852
        %v919 = vpop.permute.xlu0 %918
        %922 = vset.pattern.permute.xlu0 0
        %923 = vperm.xlu0 %922, %v853
        %v924 = vpop.permute.xlu0 %923
        %927 = vset.pattern.permute.xlu0 0
        %928 = vperm.xlu0 %927, %v854
        %v929 = vpop.permute.xlu0 %928
        %932 = vset.pattern.permute.xlu0 0
        %933 = vperm.xlu0 %932, %v855
        %v934 = vpop.permute.xlu0 %933
        %937 = vset.pattern.permute.xlu0 0
        %938 = vperm.xlu0 %937, %v856
        %v939 = vpop.permute.xlu0 %938
        %942 = vset.pattern.permute.xlu0 0
        %943 = vperm.xlu0 %942, %v857
        %v944 = vpop.permute.xlu0 %943
        %947 = vset.pattern.permute.xlu0 0
        %948 = vperm.xlu0 %947, %v858
        %v949 = vpop.permute.xlu0 %948
        %952 = vset.pattern.permute.xlu0 0
        %953 = vperm.xlu0 %952, %v859
        %v954 = vpop.permute.xlu0 %953
        %957 = vset.pattern.permute.xlu0 0
        %958 = vperm.xlu0 %957, %v860
        %v959 = vpop.permute.xlu0 %958
        %962 = vset.pattern.permute.xlu0 0
        %963 = vperm.xlu0 %962, %v861
        %v964 = vpop.permute.xlu0 %963
        %967 = vset.pattern.permute.xlu0 0
        %968 = vperm.xlu0 %967, %v862
        %v969 = vpop.permute.xlu0 %968
        %972 = vset.pattern.permute.xlu0 0
        %973 = vperm.xlu0 %972, %v863
        %v974 = vpop.permute.xlu0 %973
        %977 = vset.pattern.permute.xlu0 0
        %978 = vperm.xlu0 %977, %v864
        %v979 = vpop.permute.xlu0 %978
        %982 = vset.pattern.permute.xlu0 0
        %983 = vperm.xlu0 %982, %v865
        %v984 = vpop.permute.xlu0 %983
        %987 = vset.pattern.permute.xlu0 0
        %988 = vperm.xlu0 %987, %v866
        %v989 = vpop.permute.xlu0 %988
        %992 = vset.pattern.permute.xlu0 0
        %993 = vperm.xlu0 %992, %v867
        %v994 = vpop.permute.xlu0 %993
        %v996 = vsub.f32 %v742, %v919
        %v997 = vsub.f32 %v745, %v924
        %v998 = vsub.f32 %v750, %v929
        %v999 = vsub.f32 %v753, %v934
        %v1000 = vsub.f32 %v758, %v939
        %v1001 = vsub.f32 %v761, %v944
        %v1002 = vsub.f32 %v766, %v949
        %v1003 = vsub.f32 %v769, %v954
        %v1004 = vsub.f32 %v774, %v959
        %v1005 = vsub.f32 %v777, %v964
        %v1006 = vsub.f32 %v782, %v969
        %v1007 = vsub.f32 %v785, %v974
        %v1008 = vsub.f32 %v790, %v979
        %v1009 = vsub.f32 %v793, %v984
        %v1010 = vsub.f32 %v798, %v989
        %v1011 = vsub.f32 %v801, %v994
        %v1012 = vpack.c.bf16 %v997, %v996
        %v1013 = vpack.c.bf16 %v999, %v998
        %v1014 = vpack.c.bf16 %v1001, %v1000
        %v1015 = vpack.c.bf16 %v1003, %v1002
        %v1016 = vpack.c.bf16 %v1005, %v1004
        %v1017 = vpack.c.bf16 %v1007, %v1006
        %v1018 = vpack.c.bf16 %v1009, %v1008
        %v1019 = vpack.c.bf16 %v1011, %v1010
        %v1021 = vmul.bf16 %v1012, 1069105081
        %v1022 = vpow.bf16.pop %v1021
        %v1024 = vmul.bf16 %v1013, 1069105081
        %v1025 = vpow.bf16.pop %v1024
        %v1027 = vmul.bf16 %v1014, 1069105081
        %v1028 = vpow.bf16.pop %v1027
        %v1030 = vmul.bf16 %v1015, 1069105081
        %v1031 = vpow.bf16.pop %v1030
        %v1033 = vmul.bf16 %v1016, 1069105081
        %v1034 = vpow.bf16.pop %v1033
        %v1036 = vmul.bf16 %v1017, 1069105081
        %v1037 = vpow.bf16.pop %v1036
        %v1039 = vmul.bf16 %v1018, 1069105081
        %v1040 = vpow.bf16.pop %v1039
        %v1042 = vmul.bf16 %v1019, 1069105081
        %v1043 = vpow.bf16.pop %v1042
        %v1044 = vld [vmem:[#allocation4] sm:$0xff]
        %v1045 = vld [vmem:[#allocation4 + $0x8] sm:$0xff]
        %v1046 = vld [vmem:[#allocation4 + $0x10] sm:$0xff]
        %v1047 = vld [vmem:[#allocation4 + $0x18] sm:$0xff]
        %v1048 = vld [vmem:[#allocation4 + $0x20] sm:$0xff]
        %v1049 = vld [vmem:[#allocation4 + $0x28] sm:$0xff]
        %v1050 = vld [vmem:[#allocation4 + $0x30] sm:$0xff]
        %v1051 = vld [vmem:[#allocation4 + $0x38] sm:$0xff]
        %v1052 = vld [vmem:[#allocation4 + $0x40] sm:$0xff]
        %v1053 = vld [vmem:[#allocation4 + $0x48] sm:$0xff]
        %v1054 = vld [vmem:[#allocation4 + $0x50] sm:$0xff]
        %v1055 = vld [vmem:[#allocation4 + $0x58] sm:$0xff]
        %v1056 = vld [vmem:[#allocation4 + $0x60] sm:$0xff]
        %v1057 = vld [vmem:[#allocation4 + $0x68] sm:$0xff]
        %v1058 = vld [vmem:[#allocation4 + $0x70] sm:$0xff]
        %v1059 = vld [vmem:[#allocation4 + $0x78] sm:$0xff]
        %v1060 = vmul.f32 %v885, %v1044
        %v1061 = vmul.f32 %v887, %v1045
        %v1062 = vmul.f32 %v889, %v1046
        %v1063 = vmul.f32 %v891, %v1047
        %v1064 = vmul.f32 %v893, %v1048
        %v1065 = vmul.f32 %v895, %v1049
        %v1066 = vmul.f32 %v897, %v1050
        %v1067 = vmul.f32 %v899, %v1051
        %v1068 = vmul.f32 %v901, %v1052
        %v1069 = vmul.f32 %v903, %v1053
        %v1070 = vmul.f32 %v905, %v1054
        %v1071 = vmul.f32 %v907, %v1055
        %v1072 = vmul.f32 %v909, %v1056
        %v1073 = vmul.f32 %v911, %v1057
        %v1074 = vmul.f32 %v913, %v1058
        %v1075 = vmul.f32 %v915, %v1059
        %v1076 = vunpack.c.l.bf16 %v1022
        %v1077 = vunpack.c.h.bf16 %v1022
        %v1078 = vunpack.c.l.bf16 %v1025
        %v1079 = vunpack.c.h.bf16 %v1025
        %v1080 = vunpack.c.l.bf16 %v1028
        %v1081 = vunpack.c.h.bf16 %v1028
        %v1082 = vunpack.c.l.bf16 %v1031
        %v1083 = vunpack.c.h.bf16 %v1031
        %v1084 = vunpack.c.l.bf16 %v1034
        %v1085 = vunpack.c.h.bf16 %v1034
        %v1086 = vunpack.c.l.bf16 %v1037
        %v1087 = vunpack.c.h.bf16 %v1037
        %v1088 = vunpack.c.l.bf16 %v1040
        %v1089 = vunpack.c.h.bf16 %v1040
        %v1090 = vunpack.c.l.bf16 %v1043
        %v1091 = vunpack.c.h.bf16 %v1043
        %1092 = vadd.xlane.f32.xlu0 %v1076
        %v1093 = vpop.xlane.xlu0 %1092
        %1094 = vadd.xlane.f32.xlu0 %v1077
        %v1095 = vpop.xlane.xlu0 %1094
        %1096 = vadd.xlane.f32.xlu0 %v1078
        %v1097 = vpop.xlane.xlu0 %1096
        %1098 = vadd.xlane.f32.xlu0 %v1079
        %v1099 = vpop.xlane.xlu0 %1098
        %1100 = vadd.xlane.f32.xlu0 %v1080
        %v1101 = vpop.xlane.xlu0 %1100
        %1102 = vadd.xlane.f32.xlu0 %v1081
        %v1103 = vpop.xlane.xlu0 %1102
        %1104 = vadd.xlane.f32.xlu0 %v1082
        %v1105 = vpop.xlane.xlu0 %1104
        %1106 = vadd.xlane.f32.xlu0 %v1083
        %v1107 = vpop.xlane.xlu0 %1106
        %1108 = vadd.xlane.f32.xlu0 %v1084
        %v1109 = vpop.xlane.xlu0 %1108
        %1110 = vadd.xlane.f32.xlu0 %v1085
        %v1111 = vpop.xlane.xlu0 %1110
        %1112 = vadd.xlane.f32.xlu0 %v1086
        %v1113 = vpop.xlane.xlu0 %1112
        %1114 = vadd.xlane.f32.xlu0 %v1087
        %v1115 = vpop.xlane.xlu0 %1114
        %1116 = vadd.xlane.f32.xlu0 %v1088
        %v1117 = vpop.xlane.xlu0 %1116
        %1118 = vadd.xlane.f32.xlu0 %v1089
        %v1119 = vpop.xlane.xlu0 %1118
        %1120 = vadd.xlane.f32.xlu0 %v1090
        %v1121 = vpop.xlane.xlu0 %1120
        %1122 = vadd.xlane.f32.xlu0 %v1091
        %v1123 = vpop.xlane.xlu0 %1122
        %v1124 = vadd.f32 %v1060, %v1093
        %v1125 = vadd.f32 %v1061, %v1095
        %v1126 = vadd.f32 %v1062, %v1097
        %v1127 = vadd.f32 %v1063, %v1099
        %v1128 = vadd.f32 %v1064, %v1101
        %v1129 = vadd.f32 %v1065, %v1103
        %v1130 = vadd.f32 %v1066, %v1105
        %v1131 = vadd.f32 %v1067, %v1107
        %v1132 = vadd.f32 %v1068, %v1109
        %v1133 = vadd.f32 %v1069, %v1111
        %v1134 = vadd.f32 %v1070, %v1113
        %v1135 = vadd.f32 %v1071, %v1115
        %v1136 = vadd.f32 %v1072, %v1117
        %v1137 = vadd.f32 %v1073, %v1119
        %v1138 = vadd.f32 %v1074, %v1121
        %v1139 = vadd.f32 %v1075, %v1123
        %vm1140 = vcmask 7168
        %1141 = vst.msk [vmem:[#allocation4] sm:$0xff] %vm1140, %v1124
        %1142 = vst.msk [vmem:[#allocation4 + $0x8] sm:$0xff] %vm1140, %v1125
        %1143 = vst.msk [vmem:[#allocation4 + $0x10] sm:$0xff] %vm1140, %v1126
        %1144 = vst.msk [vmem:[#allocation4 + $0x18] sm:$0xff] %vm1140, %v1127
        %1145 = vst.msk [vmem:[#allocation4 + $0x20] sm:$0xff] %vm1140, %v1128
        %1146 = vst.msk [vmem:[#allocation4 + $0x28] sm:$0xff] %vm1140, %v1129
        %1147 = vst.msk [vmem:[#allocation4 + $0x30] sm:$0xff] %vm1140, %v1130
        %1148 = vst.msk [vmem:[#allocation4 + $0x38] sm:$0xff] %vm1140, %v1131
        %1149 = vst.msk [vmem:[#allocation4 + $0x40] sm:$0xff] %vm1140, %v1132
        %1150 = vst.msk [vmem:[#allocation4 + $0x48] sm:$0xff] %vm1140, %v1133
        %1151 = vst.msk [vmem:[#allocation4 + $0x50] sm:$0xff] %vm1140, %v1134
        %1152 = vst.msk [vmem:[#allocation4 + $0x58] sm:$0xff] %vm1140, %v1135
        %1153 = vst.msk [vmem:[#allocation4 + $0x60] sm:$0xff] %vm1140, %v1136
        %1154 = vst.msk [vmem:[#allocation4 + $0x68] sm:$0xff] %vm1140, %v1137
        %1155 = vst.msk [vmem:[#allocation4 + $0x70] sm:$0xff] %vm1140, %v1138
        %1156 = vst.msk [vmem:[#allocation4 + $0x78] sm:$0xff] %vm1140, %v1139
        %1157 = vst.msk [vmem:[#allocation3] sm:$0xff] %vm1140, %v852
        %1158 = vst.msk [vmem:[#allocation3 + $0x8] sm:$0xff] %vm1140, %v853
        %1159 = vst.msk [vmem:[#allocation3 + $0x10] sm:$0xff] %vm1140, %v854
        %1160 = vst.msk [vmem:[#allocation3 + $0x18] sm:$0xff] %vm1140, %v855
        %1161 = vst.msk [vmem:[#allocation3 + $0x20] sm:$0xff] %vm1140, %v856
        %1162 = vst.msk [vmem:[#allocation3 + $0x28] sm:$0xff] %vm1140, %v857
        %1163 = vst.msk [vmem:[#allocation3 + $0x30] sm:$0xff] %vm1140, %v858
        %1164 = vst.msk [vmem:[#allocation3 + $0x38] sm:$0xff] %vm1140, %v859
        %1165 = vst.msk [vmem:[#allocation3 + $0x40] sm:$0xff] %vm1140, %v860
        %1166 = vst.msk [vmem:[#allocation3 + $0x48] sm:$0xff] %vm1140, %v861
        %1167 = vst.msk [vmem:[#allocation3 + $0x50] sm:$0xff] %vm1140, %v862
        %1168 = vst.msk [vmem:[#allocation3 + $0x58] sm:$0xff] %vm1140, %v863
        %1169 = vst.msk [vmem:[#allocation3 + $0x60] sm:$0xff] %vm1140, %v864
        %1170 = vst.msk [vmem:[#allocation3 + $0x68] sm:$0xff] %vm1140, %v865
        %1171 = vst.msk [vmem:[#allocation3 + $0x70] sm:$0xff] %vm1140, %v866
        %1172 = vst.msk [vmem:[#allocation3 + $0x78] sm:$0xff] %vm1140, %v867
        %v1189 = vunpack.c.l.b16 %v530
        %v1190 = vunpack.c.l.b16 %v531
        %v1191 = vunpack.c.l.b16 %v532
        %v1192 = vunpack.c.l.b16 %v533
        %v1193 = vunpack.c.l.b16 %v534
        %v1194 = vunpack.c.l.b16 %v535
        %v1195 = vunpack.c.l.b16 %v536
        %v1196 = vunpack.c.l.b16 %v537
        %v1197 = vunpack.c.l.b16 %v538
        %v1198 = vunpack.c.l.b16 %v539
        %v1199 = vunpack.c.l.b16 %v540
        %v1200 = vunpack.c.l.b16 %v541
        %v1201 = vunpack.c.l.b16 %v542
        %v1202 = vunpack.c.l.b16 %v543
        %v1203 = vunpack.c.l.b16 %v544
        %v1204 = vunpack.c.l.b16 %v545
        %v1205 = vpack.c.b16 %v1190, %v1189
        %v1206 = vpack.c.b16 %v1192, %v1191
        %v1207 = vpack.c.b16 %v1194, %v1193
        %v1208 = vpack.c.b16 %v1196, %v1195
        %v1209 = vpack.c.b16 %v1198, %v1197
        %v1210 = vpack.c.b16 %v1200, %v1199
        %v1211 = vpack.c.b16 %v1202, %v1201
        %v1212 = vpack.c.b16 %v1204, %v1203
        %1221 = vmatprep.subr.bf16.mxu0 0
        %1222 = vmatpush1.bf16.msra.mxu0 %v1212
        %1223 = vmatprep.subr.bf16.mxu0 0
        %1224 = vmatpush1.bf16.msra.mxu0 %v1211
        %1225 = vmatprep.subr.bf16.mxu0 0
        %1226 = vmatpush1.bf16.msra.mxu0 %v1210
        %1227 = vmatprep.subr.bf16.mxu0 0
        %1228 = vmatpush1.bf16.msra.mxu0 %v1209
        %1229 = vmatprep.subr.bf16.mxu0 0
        %1230 = vmatpush1.bf16.msra.mxu0 %v1208
        %1231 = vmatprep.subr.bf16.mxu0 0
        %1232 = vmatpush1.bf16.msra.mxu0 %v1207
        %1233 = vmatprep.subr.bf16.mxu0 0
        %1234 = vmatpush1.bf16.msra.mxu0 %v1206
        %1235 = vmatprep.subr.bf16.mxu0 0
        %1236 = vmatpush1.bf16.msra.mxu0 %v1205
        %1237 = vmatprep.subr.bf16.mxu0 0
        %1238 = vmatpush2.bf16.msra.mxu0 0
        %1239 = vmatprep.subr.bf16.mxu0 0
        %1240 = vmatpush2.bf16.msra.mxu0 0
        %1241 = vmatprep.subr.bf16.mxu0 0
        %1242 = vmatpush2.bf16.msra.mxu0 0
        %1243 = vmatprep.subr.bf16.mxu0 0
        %1244 = vmatpush2.bf16.msra.mxu0 0
        %1245 = vmatprep.subr.bf16.mxu0 0
        %1246 = vmatpush2.bf16.msra.mxu0 0
        %1247 = vmatprep.subr.bf16.mxu0 0
        %1248 = vmatpush2.bf16.msra.mxu0 0
        %1249 = vmatprep.subr.bf16.mxu0 0
        %1250 = vmatpush2.bf16.msra.mxu0 0
        %1251 = vmatprep.subr.bf16.mxu0 0
        %1252 = vmatpush2.bf16.msra.mxu0 0
        %1253 = vmatprep.mubr.bf16.mxu0 0
        %1254 = vmatmul.mubr.bf16.gmra.mxu0 %v1022
        %v1255 = vpop.f32.mrf.mxu0
        %v1256 = vadd.f32 0.0, %v1255
        %v1257 = vpop.f32.mrf.mxu0
        %v1258 = vpop.f32.mrf.mxu0
        %v1259 = vadd.f32 0.0, %v1258
        %v1260 = vpop.f32.mrf.mxu0
        %1261 = vmatprep.mubr.bf16.mxu0 0
        %1262 = vmatmul.mubr.bf16.gmra.mxu0 %v1025
        %v1263 = vpop.f32.mrf.mxu0
        %v1264 = vadd.f32 0.0, %v1263
        %v1265 = vpop.f32.mrf.mxu0
        %v1266 = vpop.f32.mrf.mxu0
        %v1267 = vadd.f32 0.0, %v1266
        %v1268 = vpop.f32.mrf.mxu0
        %1269 = vmatprep.mubr.bf16.mxu0 0
        %1270 = vmatmul.mubr.bf16.gmra.mxu0 %v1028
        %v1271 = vpop.f32.mrf.mxu0
        %v1272 = vadd.f32 0.0, %v1271
        %v1273 = vpop.f32.mrf.mxu0
        %v1274 = vpop.f32.mrf.mxu0
        %v1275 = vadd.f32 0.0, %v1274
        %v1276 = vpop.f32.mrf.mxu0
        %1277 = vmatprep.mubr.bf16.mxu0 0
        %1278 = vmatmul.mubr.bf16.gmra.mxu0 %v1031
        %v1279 = vpop.f32.mrf.mxu0
        %v1280 = vadd.f32 0.0, %v1279
        %v1281 = vpop.f32.mrf.mxu0
        %v1282 = vpop.f32.mrf.mxu0
        %v1283 = vadd.f32 0.0, %v1282
        %v1284 = vpop.f32.mrf.mxu0
        %1285 = vmatprep.mubr.bf16.mxu0 0
        %1286 = vmatmul.mubr.bf16.gmra.mxu0 %v1034
        %v1287 = vpop.f32.mrf.mxu0
        %v1288 = vadd.f32 0.0, %v1287
        %v1289 = vpop.f32.mrf.mxu0
        %v1290 = vpop.f32.mrf.mxu0
        %v1291 = vadd.f32 0.0, %v1290
        %v1292 = vpop.f32.mrf.mxu0
        %1293 = vmatprep.mubr.bf16.mxu0 0
        %1294 = vmatmul.mubr.bf16.gmra.mxu0 %v1037
        %v1295 = vpop.f32.mrf.mxu0
        %v1296 = vadd.f32 0.0, %v1295
        %v1297 = vpop.f32.mrf.mxu0
        %v1298 = vpop.f32.mrf.mxu0
        %v1299 = vadd.f32 0.0, %v1298
        %v1300 = vpop.f32.mrf.mxu0
        %1301 = vmatprep.mubr.bf16.mxu0 0
        %1302 = vmatmul.mubr.bf16.gmra.mxu0 %v1040
        %v1303 = vpop.f32.mrf.mxu0
        %v1304 = vadd.f32 0.0, %v1303
        %v1305 = vpop.f32.mrf.mxu0
        %v1306 = vpop.f32.mrf.mxu0
        %v1307 = vadd.f32 0.0, %v1306
        %v1308 = vpop.f32.mrf.mxu0
        %1309 = vmatprep.mubr.bf16.mxu0 0
        %1310 = vmatmul.mubr.bf16.gmra.mxu0 %v1043
        %v1311 = vpop.f32.mrf.mxu0
        %v1312 = vadd.f32 0.0, %v1311
        %v1313 = vpop.f32.mrf.mxu0
        %v1314 = vpop.f32.mrf.mxu0
        %v1315 = vadd.f32 0.0, %v1314
        %v1316 = vpop.f32.mrf.mxu0
        %1317 = vdwg.mxu0
        %1319 = vset.pattern.permute.xlu0 0
        %1320 = vperm.xlu0 %1319, %v885
        %v1321 = vpop.permute.xlu0 %1320
        %1324 = vset.pattern.permute.xlu0 0
        %1325 = vperm.xlu0 %1324, %v887
        %v1326 = vpop.permute.xlu0 %1325
        %1329 = vset.pattern.permute.xlu0 0
        %1330 = vperm.xlu0 %1329, %v889
        %v1331 = vpop.permute.xlu0 %1330
        %1334 = vset.pattern.permute.xlu0 0
        %1335 = vperm.xlu0 %1334, %v891
        %v1336 = vpop.permute.xlu0 %1335
        %1339 = vset.pattern.permute.xlu0 0
        %1340 = vperm.xlu0 %1339, %v893
        %v1341 = vpop.permute.xlu0 %1340
        %1344 = vset.pattern.permute.xlu0 0
        %1345 = vperm.xlu0 %1344, %v895
        %v1346 = vpop.permute.xlu0 %1345
        %1349 = vset.pattern.permute.xlu0 0
        %1350 = vperm.xlu0 %1349, %v897
        %v1351 = vpop.permute.xlu0 %1350
        %1354 = vset.pattern.permute.xlu0 0
        %1355 = vperm.xlu0 %1354, %v899
        %v1356 = vpop.permute.xlu0 %1355
        %1359 = vset.pattern.permute.xlu0 0
        %1360 = vperm.xlu0 %1359, %v901
        %v1361 = vpop.permute.xlu0 %1360
        %1364 = vset.pattern.permute.xlu0 0
        %1365 = vperm.xlu0 %1364, %v903
        %v1366 = vpop.permute.xlu0 %1365
        %1369 = vset.pattern.permute.xlu0 0
        %1370 = vperm.xlu0 %1369, %v905
        %v1371 = vpop.permute.xlu0 %1370
        %1374 = vset.pattern.permute.xlu0 0
        %1375 = vperm.xlu0 %1374, %v907
        %v1376 = vpop.permute.xlu0 %1375
        %1379 = vset.pattern.permute.xlu0 0
        %1380 = vperm.xlu0 %1379, %v909
        %v1381 = vpop.permute.xlu0 %1380
        %1384 = vset.pattern.permute.xlu0 0
        %1385 = vperm.xlu0 %1384, %v911
        %v1386 = vpop.permute.xlu0 %1385
        %1389 = vset.pattern.permute.xlu0 0
        %1390 = vperm.xlu0 %1389, %v913
        %v1391 = vpop.permute.xlu0 %1390
        %1394 = vset.pattern.permute.xlu0 0
        %1395 = vperm.xlu0 %1394, %v915
        %v1396 = vpop.permute.xlu0 %1395
        %v1398 = vmul.f32 %v1321, %v562
        %v1399 = vmul.f32 %v1326, %v563
        %v1400 = vmul.f32 %v1331, %v564
        %v1401 = vmul.f32 %v1336, %v565
        %v1402 = vmul.f32 %v1341, %v566
        %v1403 = vmul.f32 %v1346, %v567
        %v1404 = vmul.f32 %v1351, %v568
        %v1405 = vmul.f32 %v1356, %v569
        %v1406 = vmul.f32 %v1361, %v570
        %v1407 = vmul.f32 %v1366, %v571
        %v1408 = vmul.f32 %v1371, %v572
        %v1409 = vmul.f32 %v1376, %v573
        %v1410 = vmul.f32 %v1381, %v574
        %v1411 = vmul.f32 %v1386, %v575
        %v1412 = vmul.f32 %v1391, %v576
        %v1413 = vmul.f32 %v1396, %v577
        %v1414 = vadd.f32 %v1398, %v1256
        %v1415 = vadd.f32 %v1399, %v1259
        %v1416 = vadd.f32 %v1400, %v1264
        %v1417 = vadd.f32 %v1401, %v1267
        %v1418 = vadd.f32 %v1402, %v1272
        %v1419 = vadd.f32 %v1403, %v1275
        %v1420 = vadd.f32 %v1404, %v1280
        %v1421 = vadd.f32 %v1405, %v1283
        %v1422 = vadd.f32 %v1406, %v1288
        %v1423 = vadd.f32 %v1407, %v1291
        %v1424 = vadd.f32 %v1408, %v1296
        %v1425 = vadd.f32 %v1409, %v1299
        %v1426 = vadd.f32 %v1410, %v1304
        %v1427 = vadd.f32 %v1411, %v1307
        %v1428 = vadd.f32 %v1412, %v1312
        %v1429 = vadd.f32 %v1413, %v1315
        %1430 = vrot.lane.b32.xlu0 %v610, 64
        %v1431 = vpop.permute.xlu0 %1430
        %1432 = vrot.lane.b32.xlu0 %v611, 64
        %v1433 = vpop.permute.xlu0 %1432
        %1434 = vrot.lane.b32.xlu0 %v612, 64
        %v1435 = vpop.permute.xlu0 %1434
        %1436 = vrot.lane.b32.xlu0 %v613, 64
        %v1437 = vpop.permute.xlu0 %1436
        %1438 = vrot.lane.b32.xlu0 %v614, 64
        %v1439 = vpop.permute.xlu0 %1438
        %1440 = vrot.lane.b32.xlu0 %v615, 64
        %v1441 = vpop.permute.xlu0 %1440
        %1442 = vrot.lane.b32.xlu0 %v616, 64
        %v1443 = vpop.permute.xlu0 %1442
        %1444 = vrot.lane.b32.xlu0 %v617, 64
        %v1445 = vpop.permute.xlu0 %1444
        %1446 = vrot.lane.b32.xlu0 %v650, 64
        %v1447 = vpop.permute.xlu0 %1446
        %1448 = vrot.lane.b32.xlu0 %v651, 64
        %v1449 = vpop.permute.xlu0 %1448
        %1450 = vrot.lane.b32.xlu0 %v652, 64
        %v1451 = vpop.permute.xlu0 %1450
        %1452 = vrot.lane.b32.xlu0 %v653, 64
        %v1453 = vpop.permute.xlu0 %1452
        %1454 = vrot.lane.b32.xlu0 %v654, 64
        %v1455 = vpop.permute.xlu0 %1454
        %1456 = vrot.lane.b32.xlu0 %v655, 64
        %v1457 = vpop.permute.xlu0 %1456
        %1458 = vrot.lane.b32.xlu0 %v656, 64
        %v1459 = vpop.permute.xlu0 %1458
        %1460 = vrot.lane.b32.xlu0 %v657, 64
        %v1461 = vpop.permute.xlu0 %1460
        %v1463 = vsel %vm658, %v1431, 0
        %v1466 = vsel %vm658, %v1433, 0
        %v1469 = vsel %vm658, %v1435, 0
        %v1472 = vsel %vm658, %v1437, 0
        %v1475 = vsel %vm658, %v1439, 0
        %v1478 = vsel %vm658, %v1441, 0
        %v1481 = vsel %vm658, %v1443, 0
        %v1484 = vsel %vm658, %v1445, 0
        %v1487 = vsel %vm658, %v1447, 0
        %v1490 = vsel %vm658, %v1449, 0
        %v1493 = vsel %vm658, %v1451, 0
        %v1496 = vsel %vm658, %v1453, 0
        %v1499 = vsel %vm658, %v1455, 0
        %v1502 = vsel %vm658, %v1457, 0
        %v1505 = vsel %vm658, %v1459, 0
        %v1508 = vsel %vm658, %v1461, 0
        %1510 = vmatprep.subr.bf16.mxu0 0
        %1511 = vmatpush1.bf16.xpose.msra.mxu0 %v1508
        %1512 = vmatprep.subr.bf16.mxu0 0
        %1513 = vmatpush1.bf16.xpose.msra.mxu0 %v1505
        %1514 = vmatprep.subr.bf16.mxu0 0
        %1515 = vmatpush1.bf16.xpose.msra.mxu0 %v1502
        %1516 = vmatprep.subr.bf16.mxu0 0
        %1517 = vmatpush1.bf16.xpose.msra.mxu0 %v1499
        %1518 = vmatprep.subr.bf16.mxu0 0
        %1519 = vmatpush1.bf16.xpose.msra.mxu0 %v1496
        %1520 = vmatprep.subr.bf16.mxu0 0
        %1521 = vmatpush1.bf16.xpose.msra.mxu0 %v1493
        %1522 = vmatprep.subr.bf16.mxu0 0
        %1523 = vmatpush1.bf16.xpose.msra.mxu0 %v1490
        %1524 = vmatprep.subr.bf16.mxu0 0
        %1525 = vmatpush1.bf16.xpose.msra.mxu0 %v1487
        %1526 = vmatprep.subr.bf16.mxu0 0
        %1527 = vmatpush2.bf16.xpose.msra.mxu0 0
        %1528 = vmatprep.subr.bf16.mxu0 0
        %1529 = vmatpush2.bf16.xpose.msra.mxu0 0
        %1530 = vmatprep.subr.bf16.mxu0 0
        %1531 = vmatpush2.bf16.xpose.msra.mxu0 0
        %1532 = vmatprep.subr.bf16.mxu0 0
        %1533 = vmatpush2.bf16.xpose.msra.mxu0 0
        %1534 = vmatprep.subr.bf16.mxu0 0
        %1535 = vmatpush2.bf16.xpose.msra.mxu0 0
        %1536 = vmatprep.subr.bf16.mxu0 0
        %1537 = vmatpush2.bf16.xpose.msra.mxu0 0
        %1538 = vmatprep.subr.bf16.mxu0 0
        %1539 = vmatpush2.bf16.xpose.msra.mxu0 0
        %1540 = vmatprep.subr.bf16.mxu0 0
        %1541 = vmatpush2.bf16.xpose.msra.mxu0 0
        %1542 = vmatprep.mubr.bf16.mxu0 0
        %1543 = vmatmul.mubr.bf16.gmra.mxu0 %v1463
        %v1544 = vpop.f32.mrf.mxu0
        %v1545 = vadd.f32 0.0, %v1544
        %v1546 = vpop.f32.mrf.mxu0
        %v1547 = vpop.f32.mrf.mxu0
        %v1548 = vadd.f32 0.0, %v1547
        %v1549 = vpop.f32.mrf.mxu0
        %1550 = vmatprep.mubr.bf16.mxu0 0
        %1551 = vmatmul.mubr.bf16.gmra.mxu0 %v1466
        %v1552 = vpop.f32.mrf.mxu0
        %v1553 = vadd.f32 0.0, %v1552
        %v1554 = vpop.f32.mrf.mxu0
        %v1555 = vpop.f32.mrf.mxu0
        %v1556 = vadd.f32 0.0, %v1555
        %v1557 = vpop.f32.mrf.mxu0
        %1558 = vmatprep.mubr.bf16.mxu0 0
        %1559 = vmatmul.mubr.bf16.gmra.mxu0 %v1469
        %v1560 = vpop.f32.mrf.mxu0
        %v1561 = vadd.f32 0.0, %v1560
        %v1562 = vpop.f32.mrf.mxu0
        %v1563 = vpop.f32.mrf.mxu0
        %v1564 = vadd.f32 0.0, %v1563
        %v1565 = vpop.f32.mrf.mxu0
        %1566 = vmatprep.mubr.bf16.mxu0 0
        %1567 = vmatmul.mubr.bf16.gmra.mxu0 %v1472
        %v1568 = vpop.f32.mrf.mxu0
        %v1569 = vadd.f32 0.0, %v1568
        %v1570 = vpop.f32.mrf.mxu0
        %v1571 = vpop.f32.mrf.mxu0
        %v1572 = vadd.f32 0.0, %v1571
        %v1573 = vpop.f32.mrf.mxu0
        %1574 = vmatprep.mubr.bf16.mxu0 0
        %1575 = vmatmul.mubr.bf16.gmra.mxu0 %v1475
        %v1576 = vpop.f32.mrf.mxu0
        %v1577 = vadd.f32 0.0, %v1576
        %v1578 = vpop.f32.mrf.mxu0
        %v1579 = vpop.f32.mrf.mxu0
        %v1580 = vadd.f32 0.0, %v1579
        %v1581 = vpop.f32.mrf.mxu0
        %1582 = vmatprep.mubr.bf16.mxu0 0
        %1583 = vmatmul.mubr.bf16.gmra.mxu0 %v1478
        %v1584 = vpop.f32.mrf.mxu0
        %v1585 = vadd.f32 0.0, %v1584
        %v1586 = vpop.f32.mrf.mxu0
        %v1587 = vpop.f32.mrf.mxu0
        %v1588 = vadd.f32 0.0, %v1587
        %v1589 = vpop.f32.mrf.mxu0
        %1590 = vmatprep.mubr.bf16.mxu0 0
        %1591 = vmatmul.mubr.bf16.gmra.mxu0 %v1481
        %v1592 = vpop.f32.mrf.mxu0
        %v1593 = vadd.f32 0.0, %v1592
        %v1594 = vpop.f32.mrf.mxu0
        %v1595 = vpop.f32.mrf.mxu0
        %v1596 = vadd.f32 0.0, %v1595
        %v1597 = vpop.f32.mrf.mxu0
        %1598 = vmatprep.mubr.bf16.mxu0 0
        %1599 = vmatmul.mubr.bf16.gmra.mxu0 %v1484
        %v1600 = vpop.f32.mrf.mxu0
        %v1601 = vadd.f32 0.0, %v1600
        %v1602 = vpop.f32.mrf.mxu0
        %v1603 = vpop.f32.mrf.mxu0
        %v1604 = vadd.f32 0.0, %v1603
        %v1605 = vpop.f32.mrf.mxu0
        %1606 = vdwg.mxu0
        %s1607 = scalar_lea.vmem [#allocation3], 128
        %v1608 = vld [vmem:[%s1607] sm:$0xff]
        %v1609 = vld [vmem:[%s1607 + $0x8] sm:$0xff]
        %v1610 = vld [vmem:[%s1607 + $0x10] sm:$0xff]
        %v1611 = vld [vmem:[%s1607 + $0x18] sm:$0xff]
        %v1612 = vld [vmem:[%s1607 + $0x20] sm:$0xff]
        %v1613 = vld [vmem:[%s1607 + $0x28] sm:$0xff]
        %v1614 = vld [vmem:[%s1607 + $0x30] sm:$0xff]
        %v1615 = vld [vmem:[%s1607 + $0x38] sm:$0xff]
        %v1616 = vld [vmem:[%s1607 + $0x40] sm:$0xff]
        %v1617 = vld [vmem:[%s1607 + $0x48] sm:$0xff]
        %v1618 = vld [vmem:[%s1607 + $0x50] sm:$0xff]
        %v1619 = vld [vmem:[%s1607 + $0x58] sm:$0xff]
        %v1620 = vld [vmem:[%s1607 + $0x60] sm:$0xff]
        %v1621 = vld [vmem:[%s1607 + $0x68] sm:$0xff]
        %v1622 = vld [vmem:[%s1607 + $0x70] sm:$0xff]
        %v1623 = vld [vmem:[%s1607 + $0x78] sm:$0xff]
        %1624 = vmax.xlane.f32.xlu0 %v1545
        %v1625 = vpop.xlane.xlu0 %1624
        %1626 = vmax.xlane.f32.xlu0 %v1548
        %v1627 = vpop.xlane.xlu0 %1626
        %1628 = vmax.xlane.f32.xlu0 %v1553
        %v1629 = vpop.xlane.xlu0 %1628
        %1630 = vmax.xlane.f32.xlu0 %v1556
        %v1631 = vpop.xlane.xlu0 %1630
        %1632 = vmax.xlane.f32.xlu0 %v1561
        %v1633 = vpop.xlane.xlu0 %1632
        %1634 = vmax.xlane.f32.xlu0 %v1564
        %v1635 = vpop.xlane.xlu0 %1634
        %1636 = vmax.xlane.f32.xlu0 %v1569
        %v1637 = vpop.xlane.xlu0 %1636
        %1638 = vmax.xlane.f32.xlu0 %v1572
        %v1639 = vpop.xlane.xlu0 %1638
        %1640 = vmax.xlane.f32.xlu0 %v1577
        %v1641 = vpop.xlane.xlu0 %1640
        %1642 = vmax.xlane.f32.xlu0 %v1580
        %v1643 = vpop.xlane.xlu0 %1642
        %1644 = vmax.xlane.f32.xlu0 %v1585
        %v1645 = vpop.xlane.xlu0 %1644
        %1646 = vmax.xlane.f32.xlu0 %v1588
        %v1647 = vpop.xlane.xlu0 %1646
        %1648 = vmax.xlane.f32.xlu0 %v1593
        %v1649 = vpop.xlane.xlu0 %1648
        %1650 = vmax.xlane.f32.xlu0 %v1596
        %v1651 = vpop.xlane.xlu0 %1650
        %1652 = vmax.xlane.f32.xlu0 %v1601
        %v1653 = vpop.xlane.xlu0 %1652
        %1654 = vmax.xlane.f32.xlu0 %v1604
        %v1655 = vpop.xlane.xlu0 %1654
        %v1656 = vmax.f32 %v1608, %v1625
        %v1657 = vmax.f32 %v1609, %v1627
        %v1658 = vmax.f32 %v1610, %v1629
        %v1659 = vmax.f32 %v1611, %v1631
        %v1660 = vmax.f32 %v1612, %v1633
        %v1661 = vmax.f32 %v1613, %v1635
        %v1662 = vmax.f32 %v1614, %v1637
        %v1663 = vmax.f32 %v1615, %v1639
        %v1664 = vmax.f32 %v1616, %v1641
        %v1665 = vmax.f32 %v1617, %v1643
        %v1666 = vmax.f32 %v1618, %v1645
        %v1667 = vmax.f32 %v1619, %v1647
        %v1668 = vmax.f32 %v1620, %v1649
        %v1669 = vmax.f32 %v1621, %v1651
        %v1670 = vmax.f32 %v1622, %v1653
        %v1671 = vmax.f32 %v1623, %v1655
        %v1672 = vsub.f32 %v1608, %v1656
        %v1673 = vsub.f32 %v1609, %v1657
        %v1674 = vsub.f32 %v1610, %v1658
        %v1675 = vsub.f32 %v1611, %v1659
        %v1676 = vsub.f32 %v1612, %v1660
        %v1677 = vsub.f32 %v1613, %v1661
        %v1678 = vsub.f32 %v1614, %v1662
        %v1679 = vsub.f32 %v1615, %v1663
        %v1680 = vsub.f32 %v1616, %v1664
        %v1681 = vsub.f32 %v1617, %v1665
        %v1682 = vsub.f32 %v1618, %v1666
        %v1683 = vsub.f32 %v1619, %v1667
        %v1684 = vsub.f32 %v1620, %v1668
        %v1685 = vsub.f32 %v1621, %v1669
        %v1686 = vsub.f32 %v1622, %v1670
        %v1687 = vsub.f32 %v1623, %v1671
        %v1688 = vmul.f32 %v1672, 1.442695
        %v1689 = vpow.pop %v1688
        %v1690 = vmul.f32 %v1673, 1.442695
        %v1691 = vpow.pop %v1690
        %v1692 = vmul.f32 %v1674, 1.442695
        %v1693 = vpow.pop %v1692
        %v1694 = vmul.f32 %v1675, 1.442695
        %v1695 = vpow.pop %v1694
        %v1696 = vmul.f32 %v1676, 1.442695
        %v1697 = vpow.pop %v1696
        %v1698 = vmul.f32 %v1677, 1.442695
        %v1699 = vpow.pop %v1698
        %v1700 = vmul.f32 %v1678, 1.442695
        %v1701 = vpow.pop %v1700
        %v1702 = vmul.f32 %v1679, 1.442695
        %v1703 = vpow.pop %v1702
        %v1704 = vmul.f32 %v1680, 1.442695
        %v1705 = vpow.pop %v1704
        %v1706 = vmul.f32 %v1681, 1.442695
        %v1707 = vpow.pop %v1706
        %v1708 = vmul.f32 %v1682, 1.442695
        %v1709 = vpow.pop %v1708
        %v1710 = vmul.f32 %v1683, 1.442695
        %v1711 = vpow.pop %v1710
        %v1712 = vmul.f32 %v1684, 1.442695
        %v1713 = vpow.pop %v1712
        %v1714 = vmul.f32 %v1685, 1.442695
        %v1715 = vpow.pop %v1714
        %v1716 = vmul.f32 %v1686, 1.442695
        %v1717 = vpow.pop %v1716
        %v1718 = vmul.f32 %v1687, 1.442695
        %v1719 = vpow.pop %v1718
        %1721 = vset.pattern.permute.xlu0 0
        %1722 = vperm.xlu0 %1721, %v1656
        %v1723 = vpop.permute.xlu0 %1722
        %1726 = vset.pattern.permute.xlu0 0
        %1727 = vperm.xlu0 %1726, %v1657
        %v1728 = vpop.permute.xlu0 %1727
        %1731 = vset.pattern.permute.xlu0 0
        %1732 = vperm.xlu0 %1731, %v1658
        %v1733 = vpop.permute.xlu0 %1732
        %1736 = vset.pattern.permute.xlu0 0
        %1737 = vperm.xlu0 %1736, %v1659
        %v1738 = vpop.permute.xlu0 %1737
        %1741 = vset.pattern.permute.xlu0 0
        %1742 = vperm.xlu0 %1741, %v1660
        %v1743 = vpop.permute.xlu0 %1742
        %1746 = vset.pattern.permute.xlu0 0
        %1747 = vperm.xlu0 %1746, %v1661
        %v1748 = vpop.permute.xlu0 %1747
        %1751 = vset.pattern.permute.xlu0 0
        %1752 = vperm.xlu0 %1751, %v1662
        %v1753 = vpop.permute.xlu0 %1752
        %1756 = vset.pattern.permute.xlu0 0
        %1757 = vperm.xlu0 %1756, %v1663
        %v1758 = vpop.permute.xlu0 %1757
        %1761 = vset.pattern.permute.xlu0 0
        %1762 = vperm.xlu0 %1761, %v1664
        %v1763 = vpop.permute.xlu0 %1762
        %1766 = vset.pattern.permute.xlu0 0
        %1767 = vperm.xlu0 %1766, %v1665
        %v1768 = vpop.permute.xlu0 %1767
        %1771 = vset.pattern.permute.xlu0 0
        %1772 = vperm.xlu0 %1771, %v1666
        %v1773 = vpop.permute.xlu0 %1772
        %1776 = vset.pattern.permute.xlu0 0
        %1777 = vperm.xlu0 %1776, %v1667
        %v1778 = vpop.permute.xlu0 %1777
        %1781 = vset.pattern.permute.xlu0 0
        %1782 = vperm.xlu0 %1781, %v1668
        %v1783 = vpop.permute.xlu0 %1782
        %1786 = vset.pattern.permute.xlu0 0
        %1787 = vperm.xlu0 %1786, %v1669
        %v1788 = vpop.permute.xlu0 %1787
        %1791 = vset.pattern.permute.xlu0 0
        %1792 = vperm.xlu0 %1791, %v1670
        %v1793 = vpop.permute.xlu0 %1792
        %1796 = vset.pattern.permute.xlu0 0
        %1797 = vperm.xlu0 %1796, %v1671
        %v1798 = vpop.permute.xlu0 %1797
        %v1800 = vsub.f32 %v1545, %v1723
        %v1801 = vsub.f32 %v1548, %v1728
        %v1802 = vsub.f32 %v1553, %v1733
        %v1803 = vsub.f32 %v1556, %v1738
        %v1804 = vsub.f32 %v1561, %v1743
        %v1805 = vsub.f32 %v1564, %v1748
        %v1806 = vsub.f32 %v1569, %v1753
        %v1807 = vsub.f32 %v1572, %v1758
        %v1808 = vsub.f32 %v1577, %v1763
        %v1809 = vsub.f32 %v1580, %v1768
        %v1810 = vsub.f32 %v1585, %v1773
        %v1811 = vsub.f32 %v1588, %v1778
        %v1812 = vsub.f32 %v1593, %v1783
        %v1813 = vsub.f32 %v1596, %v1788
        %v1814 = vsub.f32 %v1601, %v1793
        %v1815 = vsub.f32 %v1604, %v1798
        %v1816 = vpack.c.bf16 %v1801, %v1800
        %v1817 = vpack.c.bf16 %v1803, %v1802
        %v1818 = vpack.c.bf16 %v1805, %v1804
        %v1819 = vpack.c.bf16 %v1807, %v1806
        %v1820 = vpack.c.bf16 %v1809, %v1808
        %v1821 = vpack.c.bf16 %v1811, %v1810
        %v1822 = vpack.c.bf16 %v1813, %v1812
        %v1823 = vpack.c.bf16 %v1815, %v1814
        %v1825 = vmul.bf16 %v1816, 1069105081
        %v1826 = vpow.bf16.pop %v1825
        %v1828 = vmul.bf16 %v1817, 1069105081
        %v1829 = vpow.bf16.pop %v1828
        %v1831 = vmul.bf16 %v1818, 1069105081
        %v1832 = vpow.bf16.pop %v1831
        %v1834 = vmul.bf16 %v1819, 1069105081
        %v1835 = vpow.bf16.pop %v1834
        %v1837 = vmul.bf16 %v1820, 1069105081
        %v1838 = vpow.bf16.pop %v1837
        %v1840 = vmul.bf16 %v1821, 1069105081
        %v1841 = vpow.bf16.pop %v1840
        %v1843 = vmul.bf16 %v1822, 1069105081
        %v1844 = vpow.bf16.pop %v1843
        %v1846 = vmul.bf16 %v1823, 1069105081
        %v1847 = vpow.bf16.pop %v1846
        %s1848 = scalar_lea.vmem [#allocation4], 128
        %v1849 = vld [vmem:[%s1848] sm:$0xff]
        %v1850 = vld [vmem:[%s1848 + $0x8] sm:$0xff]
        %v1851 = vld [vmem:[%s1848 + $0x10] sm:$0xff]
        %v1852 = vld [vmem:[%s1848 + $0x18] sm:$0xff]
        %v1853 = vld [vmem:[%s1848 + $0x20] sm:$0xff]
        %v1854 = vld [vmem:[%s1848 + $0x28] sm:$0xff]
        %v1855 = vld [vmem:[%s1848 + $0x30] sm:$0xff]
        %v1856 = vld [vmem:[%s1848 + $0x38] sm:$0xff]
        %v1857 = vld [vmem:[%s1848 + $0x40] sm:$0xff]
        %v1858 = vld [vmem:[%s1848 + $0x48] sm:$0xff]
        %v1859 = vld [vmem:[%s1848 + $0x50] sm:$0xff]
        %v1860 = vld [vmem:[%s1848 + $0x58] sm:$0xff]
        %v1861 = vld [vmem:[%s1848 + $0x60] sm:$0xff]
        %v1862 = vld [vmem:[%s1848 + $0x68] sm:$0xff]
        %v1863 = vld [vmem:[%s1848 + $0x70] sm:$0xff]
        %v1864 = vld [vmem:[%s1848 + $0x78] sm:$0xff]
        %v1865 = vmul.f32 %v1689, %v1849
        %v1866 = vmul.f32 %v1691, %v1850
        %v1867 = vmul.f32 %v1693, %v1851
        %v1868 = vmul.f32 %v1695, %v1852
        %v1869 = vmul.f32 %v1697, %v1853
        %v1870 = vmul.f32 %v1699, %v1854
        %v1871 = vmul.f32 %v1701, %v1855
        %v1872 = vmul.f32 %v1703, %v1856
        %v1873 = vmul.f32 %v1705, %v1857
        %v1874 = vmul.f32 %v1707, %v1858
        %v1875 = vmul.f32 %v1709, %v1859
        %v1876 = vmul.f32 %v1711, %v1860
        %v1877 = vmul.f32 %v1713, %v1861
        %v1878 = vmul.f32 %v1715, %v1862
        %v1879 = vmul.f32 %v1717, %v1863
        %v1880 = vmul.f32 %v1719, %v1864
        %v1881 = vunpack.c.l.bf16 %v1826
        %v1882 = vunpack.c.h.bf16 %v1826
        %v1883 = vunpack.c.l.bf16 %v1829
        %v1884 = vunpack.c.h.bf16 %v1829
        %v1885 = vunpack.c.l.bf16 %v1832
        %v1886 = vunpack.c.h.bf16 %v1832
        %v1887 = vunpack.c.l.bf16 %v1835
        %v1888 = vunpack.c.h.bf16 %v1835
        %v1889 = vunpack.c.l.bf16 %v1838
        %v1890 = vunpack.c.h.bf16 %v1838
        %v1891 = vunpack.c.l.bf16 %v1841
        %v1892 = vunpack.c.h.bf16 %v1841
        %v1893 = vunpack.c.l.bf16 %v1844
        %v1894 = vunpack.c.h.bf16 %v1844
        %v1895 = vunpack.c.l.bf16 %v1847
        %v1896 = vunpack.c.h.bf16 %v1847
        %1897 = vadd.xlane.f32.xlu0 %v1881
        %v1898 = vpop.xlane.xlu0 %1897
        %1899 = vadd.xlane.f32.xlu0 %v1882
        %v1900 = vpop.xlane.xlu0 %1899
        %1901 = vadd.xlane.f32.xlu0 %v1883
        %v1902 = vpop.xlane.xlu0 %1901
        %1903 = vadd.xlane.f32.xlu0 %v1884
        %v1904 = vpop.xlane.xlu0 %1903
        %1905 = vadd.xlane.f32.xlu0 %v1885
        %v1906 = vpop.xlane.xlu0 %1905
        %1907 = vadd.xlane.f32.xlu0 %v1886
        %v1908 = vpop.xlane.xlu0 %1907
        %1909 = vadd.xlane.f32.xlu0 %v1887
        %v1910 = vpop.xlane.xlu0 %1909
        %1911 = vadd.xlane.f32.xlu0 %v1888
        %v1912 = vpop.xlane.xlu0 %1911
        %1913 = vadd.xlane.f32.xlu0 %v1889
        %v1914 = vpop.xlane.xlu0 %1913
        %1915 = vadd.xlane.f32.xlu0 %v1890
        %v1916 = vpop.xlane.xlu0 %1915
        %1917 = vadd.xlane.f32.xlu0 %v1891
        %v1918 = vpop.xlane.xlu0 %1917
        %1919 = vadd.xlane.f32.xlu0 %v1892
        %v1920 = vpop.xlane.xlu0 %1919
        %1921 = vadd.xlane.f32.xlu0 %v1893
        %v1922 = vpop.xlane.xlu0 %1921
        %1923 = vadd.xlane.f32.xlu0 %v1894
        %v1924 = vpop.xlane.xlu0 %1923
        %1925 = vadd.xlane.f32.xlu0 %v1895
        %v1926 = vpop.xlane.xlu0 %1925
        %1927 = vadd.xlane.f32.xlu0 %v1896
        %v1928 = vpop.xlane.xlu0 %1927
        %v1929 = vadd.f32 %v1865, %v1898
        %v1930 = vadd.f32 %v1866, %v1900
        %v1931 = vadd.f32 %v1867, %v1902
        %v1932 = vadd.f32 %v1868, %v1904
        %v1933 = vadd.f32 %v1869, %v1906
        %v1934 = vadd.f32 %v1870, %v1908
        %v1935 = vadd.f32 %v1871, %v1910
        %v1936 = vadd.f32 %v1872, %v1912
        %v1937 = vadd.f32 %v1873, %v1914
        %v1938 = vadd.f32 %v1874, %v1916
        %v1939 = vadd.f32 %v1875, %v1918
        %v1940 = vadd.f32 %v1876, %v1920
        %v1941 = vadd.f32 %v1877, %v1922
        %v1942 = vadd.f32 %v1878, %v1924
        %v1943 = vadd.f32 %v1879, %v1926
        %v1944 = vadd.f32 %v1880, %v1928
        %1945 = vst.msk [vmem:[%s1848] sm:$0xff] %vm1140, %v1929
        %1946 = vst.msk [vmem:[%s1848 + $0x8] sm:$0xff] %vm1140, %v1930
        %1947 = vst.msk [vmem:[%s1848 + $0x10] sm:$0xff] %vm1140, %v1931
        %1948 = vst.msk [vmem:[%s1848 + $0x18] sm:$0xff] %vm1140, %v1932
        %1949 = vst.msk [vmem:[%s1848 + $0x20] sm:$0xff] %vm1140, %v1933
        %1950 = vst.msk [vmem:[%s1848 + $0x28] sm:$0xff] %vm1140, %v1934
        %1951 = vst.msk [vmem:[%s1848 + $0x30] sm:$0xff] %vm1140, %v1935
        %1952 = vst.msk [vmem:[%s1848 + $0x38] sm:$0xff] %vm1140, %v1936
        %1953 = vst.msk [vmem:[%s1848 + $0x40] sm:$0xff] %vm1140, %v1937
        %1954 = vst.msk [vmem:[%s1848 + $0x48] sm:$0xff] %vm1140, %v1938
        %1955 = vst.msk [vmem:[%s1848 + $0x50] sm:$0xff] %vm1140, %v1939
        %1956 = vst.msk [vmem:[%s1848 + $0x58] sm:$0xff] %vm1140, %v1940
        %1957 = vst.msk [vmem:[%s1848 + $0x60] sm:$0xff] %vm1140, %v1941
        %1958 = vst.msk [vmem:[%s1848 + $0x68] sm:$0xff] %vm1140, %v1942
        %1959 = vst.msk [vmem:[%s1848 + $0x70] sm:$0xff] %vm1140, %v1943
        %1960 = vst.msk [vmem:[%s1848 + $0x78] sm:$0xff] %vm1140, %v1944
        %1961 = vst.msk [vmem:[%s1607] sm:$0xff] %vm1140, %v1656
        %1962 = vst.msk [vmem:[%s1607 + $0x8] sm:$0xff] %vm1140, %v1657
        %1963 = vst.msk [vmem:[%s1607 + $0x10] sm:$0xff] %vm1140, %v1658
        %1964 = vst.msk [vmem:[%s1607 + $0x18] sm:$0xff] %vm1140, %v1659
        %1965 = vst.msk [vmem:[%s1607 + $0x20] sm:$0xff] %vm1140, %v1660
        %1966 = vst.msk [vmem:[%s1607 + $0x28] sm:$0xff] %vm1140, %v1661
        %1967 = vst.msk [vmem:[%s1607 + $0x30] sm:$0xff] %vm1140, %v1662
        %1968 = vst.msk [vmem:[%s1607 + $0x38] sm:$0xff] %vm1140, %v1663
        %1969 = vst.msk [vmem:[%s1607 + $0x40] sm:$0xff] %vm1140, %v1664
        %1970 = vst.msk [vmem:[%s1607 + $0x48] sm:$0xff] %vm1140, %v1665
        %1971 = vst.msk [vmem:[%s1607 + $0x50] sm:$0xff] %vm1140, %v1666
        %1972 = vst.msk [vmem:[%s1607 + $0x58] sm:$0xff] %vm1140, %v1667
        %1973 = vst.msk [vmem:[%s1607 + $0x60] sm:$0xff] %vm1140, %v1668
        %1974 = vst.msk [vmem:[%s1607 + $0x68] sm:$0xff] %vm1140, %v1669
        %1975 = vst.msk [vmem:[%s1607 + $0x70] sm:$0xff] %vm1140, %v1670
        %1976 = vst.msk [vmem:[%s1607 + $0x78] sm:$0xff] %vm1140, %v1671
        %1977 = vrot.lane.b32.xlu0 %v1205, 64
        %v1978 = vpop.permute.xlu0 %1977
        %1979 = vrot.lane.b32.xlu0 %v1206, 64
        %v1980 = vpop.permute.xlu0 %1979
        %1981 = vrot.lane.b32.xlu0 %v1207, 64
        %v1982 = vpop.permute.xlu0 %1981
        %1983 = vrot.lane.b32.xlu0 %v1208, 64
        %v1984 = vpop.permute.xlu0 %1983
        %1985 = vrot.lane.b32.xlu0 %v1209, 64
        %v1986 = vpop.permute.xlu0 %1985
        %1987 = vrot.lane.b32.xlu0 %v1210, 64
        %v1988 = vpop.permute.xlu0 %1987
        %1989 = vrot.lane.b32.xlu0 %v1211, 64
        %v1990 = vpop.permute.xlu0 %1989
        %1991 = vrot.lane.b32.xlu0 %v1212, 64
        %v1992 = vpop.permute.xlu0 %1991
        %2001 = vmatprep.subr.bf16.mxu0 0
        %2002 = vmatpush1.bf16.msra.mxu0 %v1992
        %2003 = vmatprep.subr.bf16.mxu0 0
        %2004 = vmatpush1.bf16.msra.mxu0 %v1990
        %2005 = vmatprep.subr.bf16.mxu0 0
        %2006 = vmatpush1.bf16.msra.mxu0 %v1988
        %2007 = vmatprep.subr.bf16.mxu0 0
        %2008 = vmatpush1.bf16.msra.mxu0 %v1986
        %2009 = vmatprep.subr.bf16.mxu0 0
        %2010 = vmatpush1.bf16.msra.mxu0 %v1984
        %2011 = vmatprep.subr.bf16.mxu0 0
        %2012 = vmatpush1.bf16.msra.mxu0 %v1982
        %2013 = vmatprep.subr.bf16.mxu0 0
        %2014 = vmatpush1.bf16.msra.mxu0 %v1980
        %2015 = vmatprep.subr.bf16.mxu0 0
        %2016 = vmatpush1.bf16.msra.mxu0 %v1978
        %2017 = vmatprep.subr.bf16.mxu0 0
        %2018 = vmatpush2.bf16.msra.mxu0 0
        %2019 = vmatprep.subr.bf16.mxu0 0
        %2020 = vmatpush2.bf16.msra.mxu0 0
        %2021 = vmatprep.subr.bf16.mxu0 0
        %2022 = vmatpush2.bf16.msra.mxu0 0
        %2023 = vmatprep.subr.bf16.mxu0 0
        %2024 = vmatpush2.bf16.msra.mxu0 0
        %2025 = vmatprep.subr.bf16.mxu0 0
        %2026 = vmatpush2.bf16.msra.mxu0 0
        %2027 = vmatprep.subr.bf16.mxu0 0
        %2028 = vmatpush2.bf16.msra.mxu0 0
        %2029 = vmatprep.subr.bf16.mxu0 0
        %2030 = vmatpush2.bf16.msra.mxu0 0
        %2031 = vmatprep.subr.bf16.mxu0 0
        %2032 = vmatpush2.bf16.msra.mxu0 0
        %2033 = vmatprep.mubr.bf16.mxu0 0
        %2034 = vmatmul.mubr.bf16.gmra.mxu0 %v1826
        %v2035 = vpop.f32.mrf.mxu0
        %v2036 = vadd.f32 0.0, %v2035
        %v2037 = vpop.f32.mrf.mxu0
        %v2038 = vpop.f32.mrf.mxu0
        %v2039 = vadd.f32 0.0, %v2038
        %v2040 = vpop.f32.mrf.mxu0
        %2041 = vmatprep.mubr.bf16.mxu0 0
        %2042 = vmatmul.mubr.bf16.gmra.mxu0 %v1829
        %v2043 = vpop.f32.mrf.mxu0
        %v2044 = vadd.f32 0.0, %v2043
        %v2045 = vpop.f32.mrf.mxu0
        %v2046 = vpop.f32.mrf.mxu0
        %v2047 = vadd.f32 0.0, %v2046
        %v2048 = vpop.f32.mrf.mxu0
        %2049 = vmatprep.mubr.bf16.mxu0 0
        %2050 = vmatmul.mubr.bf16.gmra.mxu0 %v1832
        %v2051 = vpop.f32.mrf.mxu0
        %v2052 = vadd.f32 0.0, %v2051
        %v2053 = vpop.f32.mrf.mxu0
        %v2054 = vpop.f32.mrf.mxu0
        %v2055 = vadd.f32 0.0, %v2054
        %v2056 = vpop.f32.mrf.mxu0
        %2057 = vmatprep.mubr.bf16.mxu0 0
        %2058 = vmatmul.mubr.bf16.gmra.mxu0 %v1835
        %v2059 = vpop.f32.mrf.mxu0
        %v2060 = vadd.f32 0.0, %v2059
        %v2061 = vpop.f32.mrf.mxu0
        %v2062 = vpop.f32.mrf.mxu0
        %v2063 = vadd.f32 0.0, %v2062
        %v2064 = vpop.f32.mrf.mxu0
        %2065 = vmatprep.mubr.bf16.mxu0 0
        %2066 = vmatmul.mubr.bf16.gmra.mxu0 %v1838
        %v2067 = vpop.f32.mrf.mxu0
        %v2068 = vadd.f32 0.0, %v2067
        %v2069 = vpop.f32.mrf.mxu0
        %v2070 = vpop.f32.mrf.mxu0
        %v2071 = vadd.f32 0.0, %v2070
        %v2072 = vpop.f32.mrf.mxu0
        %2073 = vmatprep.mubr.bf16.mxu0 0
        %2074 = vmatmul.mubr.bf16.gmra.mxu0 %v1841
        %v2075 = vpop.f32.mrf.mxu0
        %v2076 = vadd.f32 0.0, %v2075
        %v2077 = vpop.f32.mrf.mxu0
        %v2078 = vpop.f32.mrf.mxu0
        %v2079 = vadd.f32 0.0, %v2078
        %v2080 = vpop.f32.mrf.mxu0
        %2081 = vmatprep.mubr.bf16.mxu0 0
        %2082 = vmatmul.mubr.bf16.gmra.mxu0 %v1844
        %v2083 = vpop.f32.mrf.mxu0
        %v2084 = vadd.f32 0.0, %v2083
        %v2085 = vpop.f32.mrf.mxu0
        %v2086 = vpop.f32.mrf.mxu0
        %v2087 = vadd.f32 0.0, %v2086
        %v2088 = vpop.f32.mrf.mxu0
        %2089 = vmatprep.mubr.bf16.mxu0 0
        %2090 = vmatmul.mubr.bf16.gmra.mxu0 %v1847
        %v2091 = vpop.f32.mrf.mxu0
        %v2092 = vadd.f32 0.0, %v2091
        %v2093 = vpop.f32.mrf.mxu0
        %v2094 = vpop.f32.mrf.mxu0
        %v2095 = vadd.f32 0.0, %v2094
        %v2096 = vpop.f32.mrf.mxu0
        %2097 = vdwg.mxu0
        %2099 = vset.pattern.permute.xlu0 0
        %2100 = vperm.xlu0 %2099, %v1689
        %v2101 = vpop.permute.xlu0 %2100
        %2104 = vset.pattern.permute.xlu0 0
        %2105 = vperm.xlu0 %2104, %v1691
        %v2106 = vpop.permute.xlu0 %2105
        %2109 = vset.pattern.permute.xlu0 0
        %2110 = vperm.xlu0 %2109, %v1693
        %v2111 = vpop.permute.xlu0 %2110
        %2114 = vset.pattern.permute.xlu0 0
        %2115 = vperm.xlu0 %2114, %v1695
        %v2116 = vpop.permute.xlu0 %2115
        %2119 = vset.pattern.permute.xlu0 0
        %2120 = vperm.xlu0 %2119, %v1697
        %v2121 = vpop.permute.xlu0 %2120
        %2124 = vset.pattern.permute.xlu0 0
        %2125 = vperm.xlu0 %2124, %v1699
        %v2126 = vpop.permute.xlu0 %2125
        %2129 = vset.pattern.permute.xlu0 0
        %2130 = vperm.xlu0 %2129, %v1701
        %v2131 = vpop.permute.xlu0 %2130
        %2134 = vset.pattern.permute.xlu0 0
        %2135 = vperm.xlu0 %2134, %v1703
        %v2136 = vpop.permute.xlu0 %2135
        %2139 = vset.pattern.permute.xlu0 0
        %2140 = vperm.xlu0 %2139, %v1705
        %v2141 = vpop.permute.xlu0 %2140
        %2144 = vset.pattern.permute.xlu0 0
        %2145 = vperm.xlu0 %2144, %v1707
        %v2146 = vpop.permute.xlu0 %2145
        %2149 = vset.pattern.permute.xlu0 0
        %2150 = vperm.xlu0 %2149, %v1709
        %v2151 = vpop.permute.xlu0 %2150
        %2154 = vset.pattern.permute.xlu0 0
        %2155 = vperm.xlu0 %2154, %v1711
        %v2156 = vpop.permute.xlu0 %2155
        %2159 = vset.pattern.permute.xlu0 0
        %2160 = vperm.xlu0 %2159, %v1713
        %v2161 = vpop.permute.xlu0 %2160
        %2164 = vset.pattern.permute.xlu0 0
        %2165 = vperm.xlu0 %2164, %v1715
        %v2166 = vpop.permute.xlu0 %2165
        %2169 = vset.pattern.permute.xlu0 0
        %2170 = vperm.xlu0 %2169, %v1717
        %v2171 = vpop.permute.xlu0 %2170
        %2174 = vset.pattern.permute.xlu0 0
        %2175 = vperm.xlu0 %2174, %v1719
        %v2176 = vpop.permute.xlu0 %2175
        %v2178 = vmul.f32 %v2101, %v562
        %v2179 = vmul.f32 %v2106, %v563
        %v2180 = vmul.f32 %v2111, %v564
        %v2181 = vmul.f32 %v2116, %v565
        %v2182 = vmul.f32 %v2121, %v566
        %v2183 = vmul.f32 %v2126, %v567
        %v2184 = vmul.f32 %v2131, %v568
        %v2185 = vmul.f32 %v2136, %v569
        %v2186 = vmul.f32 %v2141, %v570
        %v2187 = vmul.f32 %v2146, %v571
        %v2188 = vmul.f32 %v2151, %v572
        %v2189 = vmul.f32 %v2156, %v573
        %v2190 = vmul.f32 %v2161, %v574
        %v2191 = vmul.f32 %v2166, %v575
        %v2192 = vmul.f32 %v2171, %v576
        %v2193 = vmul.f32 %v2176, %v577
        %2210 = vrot.lane.b32.xlu0 %v2036, 64
        %v2211 = vpop.permute.xlu0 %2210
        %2212 = vrot.lane.b32.xlu0 %v2039, 64
        %v2213 = vpop.permute.xlu0 %2212
        %2214 = vrot.lane.b32.xlu0 %v2044, 64
        %v2215 = vpop.permute.xlu0 %2214
        %2216 = vrot.lane.b32.xlu0 %v2047, 64
        %v2217 = vpop.permute.xlu0 %2216
        %2218 = vrot.lane.b32.xlu0 %v2052, 64
        %v2219 = vpop.permute.xlu0 %2218
        %2220 = vrot.lane.b32.xlu0 %v2055, 64
        %v2221 = vpop.permute.xlu0 %2220
        %2222 = vrot.lane.b32.xlu0 %v2060, 64
        %v2223 = vpop.permute.xlu0 %2222
        %2224 = vrot.lane.b32.xlu0 %v2063, 64
        %v2225 = vpop.permute.xlu0 %2224
        %2226 = vrot.lane.b32.xlu0 %v2068, 64
        %v2227 = vpop.permute.xlu0 %2226
        %2228 = vrot.lane.b32.xlu0 %v2071, 64
        %v2229 = vpop.permute.xlu0 %2228
        %2230 = vrot.lane.b32.xlu0 %v2076, 64
        %v2231 = vpop.permute.xlu0 %2230
        %2232 = vrot.lane.b32.xlu0 %v2079, 64
        %v2233 = vpop.permute.xlu0 %2232
        %2234 = vrot.lane.b32.xlu0 %v2084, 64
        %v2235 = vpop.permute.xlu0 %2234
        %2236 = vrot.lane.b32.xlu0 %v2087, 64
        %v2237 = vpop.permute.xlu0 %2236
        %2238 = vrot.lane.b32.xlu0 %v2092, 64
        %v2239 = vpop.permute.xlu0 %2238
        %2240 = vrot.lane.b32.xlu0 %v2095, 64
        %v2241 = vpop.permute.xlu0 %2240
        %v2258 = vadd.f32 %v2178, %v2211
        %v2259 = vadd.f32 %v2179, %v2213
        %v2260 = vadd.f32 %v2180, %v2215
        %v2261 = vadd.f32 %v2181, %v2217
        %v2262 = vadd.f32 %v2182, %v2219
        %v2263 = vadd.f32 %v2183, %v2221
        %v2264 = vadd.f32 %v2184, %v2223
        %v2265 = vadd.f32 %v2185, %v2225
        %v2266 = vadd.f32 %v2186, %v2227
        %v2267 = vadd.f32 %v2187, %v2229
        %v2268 = vadd.f32 %v2188, %v2231
        %v2269 = vadd.f32 %v2189, %v2233
        %v2270 = vadd.f32 %v2190, %v2235
        %v2271 = vadd.f32 %v2191, %v2237
        %v2272 = vadd.f32 %v2192, %v2239
        %v2273 = vadd.f32 %v2193, %v2241
        %v2274 = vsel %vm658, %v1414, %v2258
        %v2275 = vsel %vm658, %v1415, %v2259
        %v2276 = vsel %vm658, %v1416, %v2260
        %v2277 = vsel %vm658, %v1417, %v2261
        %v2278 = vsel %vm658, %v1418, %v2262
        %v2279 = vsel %vm658, %v1419, %v2263
        %v2280 = vsel %vm658, %v1420, %v2264
        %v2281 = vsel %vm658, %v1421, %v2265
        %v2282 = vsel %vm658, %v1422, %v2266
        %v2283 = vsel %vm658, %v1423, %v2267
        %v2284 = vsel %vm658, %v1424, %v2268
        %v2285 = vsel %vm658, %v1425, %v2269
        %v2286 = vsel %vm658, %v1426, %v2270
        %v2287 = vsel %vm658, %v1427, %v2271
        %v2288 = vsel %vm658, %v1428, %v2272
        %v2289 = vsel %vm658, %v1429, %v2273
        %2290 = vst [vmem:[#allocation5] sm:$0xff] %v2274
        %2291 = vst [vmem:[#allocation5 + $0x8] sm:$0xff] %v2275
        %2292 = vst [vmem:[#allocation5 + $0x10] sm:$0xff] %v2276
        %2293 = vst [vmem:[#allocation5 + $0x18] sm:$0xff] %v2277
        %2294 = vst [vmem:[#allocation5 + $0x20] sm:$0xff] %v2278
        %2295 = vst [vmem:[#allocation5 + $0x28] sm:$0xff] %v2279
        %2296 = vst [vmem:[#allocation5 + $0x30] sm:$0xff] %v2280
        %2297 = vst [vmem:[#allocation5 + $0x38] sm:$0xff] %v2281
        %2298 = vst [vmem:[#allocation5 + $0x40] sm:$0xff] %v2282
        %2299 = vst [vmem:[#allocation5 + $0x48] sm:$0xff] %v2283
        %2300 = vst [vmem:[#allocation5 + $0x50] sm:$0xff] %v2284
        %2301 = vst [vmem:[#allocation5 + $0x58] sm:$0xff] %v2285
        %2302 = vst [vmem:[#allocation5 + $0x60] sm:$0xff] %v2286
        %2303 = vst [vmem:[#allocation5 + $0x68] sm:$0xff] %v2287
        %2304 = vst [vmem:[#allocation5 + $0x70] sm:$0xff] %v2288
        %2305 = vst [vmem:[#allocation5 + $0x78] sm:$0xff] %v2289
        %p2306 = scmp.eq.s32.totalorder %s30, 1
        // Predicated region
        $region49: #{tpu_custom_call.1} parent=31 // pred_check
          %p2307 = pneg %p2306
        $region50: #{tpu_custom_call.1} parent=31 // pred_check_branch
          %2309 = sbr.rel (%p2307) target = $region52
        $region51: #{tpu_custom_call.1} parent=31 // pred_region
          %v2310 = vld [vmem:[#allocation4] sm:$0xff]
          %v2311 = vld [vmem:[#allocation4 + $0x8] sm:$0xff]
          %v2312 = vld [vmem:[#allocation4 + $0x10] sm:$0xff]
          %v2313 = vld [vmem:[#allocation4 + $0x18] sm:$0xff]
          %v2314 = vld [vmem:[#allocation4 + $0x20] sm:$0xff]
          %v2315 = vld [vmem:[#allocation4 + $0x28] sm:$0xff]
          %v2316 = vld [vmem:[#allocation4 + $0x30] sm:$0xff]
          %v2317 = vld [vmem:[#allocation4 + $0x38] sm:$0xff]
          %v2318 = vld [vmem:[#allocation4 + $0x40] sm:$0xff]
          %v2319 = vld [vmem:[#allocation4 + $0x48] sm:$0xff]
          %v2320 = vld [vmem:[#allocation4 + $0x50] sm:$0xff]
          %v2321 = vld [vmem:[#allocation4 + $0x58] sm:$0xff]
          %v2322 = vld [vmem:[#allocation4 + $0x60] sm:$0xff]
          %v2323 = vld [vmem:[#allocation4 + $0x68] sm:$0xff]
          %v2324 = vld [vmem:[#allocation4 + $0x70] sm:$0xff]
          %v2325 = vld [vmem:[#allocation4 + $0x78] sm:$0xff]
          %v2326 = vrcp.pop %v2310
          %v2327 = vrcp.pop %v2311
          %v2328 = vrcp.pop %v2312
          %v2329 = vrcp.pop %v2313
          %v2330 = vrcp.pop %v2314
          %v2331 = vrcp.pop %v2315
          %v2332 = vrcp.pop %v2316
          %v2333 = vrcp.pop %v2317
          %v2334 = vrcp.pop %v2318
          %v2335 = vrcp.pop %v2319
          %v2336 = vrcp.pop %v2320
          %v2337 = vrcp.pop %v2321
          %v2338 = vrcp.pop %v2322
          %v2339 = vrcp.pop %v2323
          %v2340 = vrcp.pop %v2324
          %v2341 = vrcp.pop %v2325
          %2343 = vset.pattern.permute.xlu0 0
          %2344 = vperm.xlu0 %2343, %v2326
          %v2345 = vpop.permute.xlu0 %2344
          %2348 = vset.pattern.permute.xlu0 0
          %2349 = vperm.xlu0 %2348, %v2327
          %v2350 = vpop.permute.xlu0 %2349
          %2353 = vset.pattern.permute.xlu0 0
          %2354 = vperm.xlu0 %2353, %v2328
          %v2355 = vpop.permute.xlu0 %2354
          %2358 = vset.pattern.permute.xlu0 0
          %2359 = vperm.xlu0 %2358, %v2329
          %v2360 = vpop.permute.xlu0 %2359
          %2363 = vset.pattern.permute.xlu0 0
          %2364 = vperm.xlu0 %2363, %v2330
          %v2365 = vpop.permute.xlu0 %2364
          %2368 = vset.pattern.permute.xlu0 0
          %2369 = vperm.xlu0 %2368, %v2331
          %v2370 = vpop.permute.xlu0 %2369
          %2373 = vset.pattern.permute.xlu0 0
          %2374 = vperm.xlu0 %2373, %v2332
          %v2375 = vpop.permute.xlu0 %2374
          %2378 = vset.pattern.permute.xlu0 0
          %2379 = vperm.xlu0 %2378, %v2333
          %v2380 = vpop.permute.xlu0 %2379
          %2383 = vset.pattern.permute.xlu0 0
          %2384 = vperm.xlu0 %2383, %v2334
          %v2385 = vpop.permute.xlu0 %2384
          %2388 = vset.pattern.permute.xlu0 0
          %2389 = vperm.xlu0 %2388, %v2335
          %v2390 = vpop.permute.xlu0 %2389
          %2393 = vset.pattern.permute.xlu0 0
          %2394 = vperm.xlu0 %2393, %v2336
          %v2395 = vpop.permute.xlu0 %2394
          %2398 = vset.pattern.permute.xlu0 0
          %2399 = vperm.xlu0 %2398, %v2337
          %v2400 = vpop.permute.xlu0 %2399
          %2403 = vset.pattern.permute.xlu0 0
          %2404 = vperm.xlu0 %2403, %v2338
          %v2405 = vpop.permute.xlu0 %2404
          %2408 = vset.pattern.permute.xlu0 0
          %2409 = vperm.xlu0 %2408, %v2339
          %v2410 = vpop.permute.xlu0 %2409
          %2413 = vset.pattern.permute.xlu0 0
          %2414 = vperm.xlu0 %2413, %v2340
          %v2415 = vpop.permute.xlu0 %2414
          %2418 = vset.pattern.permute.xlu0 0
          %2419 = vperm.xlu0 %2418, %v2341
          %v2420 = vpop.permute.xlu0 %2419
          %v2422 = vld [vmem:[%s1848] sm:$0xff]
          %v2423 = vld [vmem:[%s1848 + $0x8] sm:$0xff]
          %v2424 = vld [vmem:[%s1848 + $0x10] sm:$0xff]
          %v2425 = vld [vmem:[%s1848 + $0x18] sm:$0xff]
          %v2426 = vld [vmem:[%s1848 + $0x20] sm:$0xff]
          %v2427 = vld [vmem:[%s1848 + $0x28] sm:$0xff]
          %v2428 = vld [vmem:[%s1848 + $0x30] sm:$0xff]
          %v2429 = vld [vmem:[%s1848 + $0x38] sm:$0xff]
          %v2430 = vld [vmem:[%s1848 + $0x40] sm:$0xff]
          %v2431 = vld [vmem:[%s1848 + $0x48] sm:$0xff]
          %v2432 = vld [vmem:[%s1848 + $0x50] sm:$0xff]
          %v2433 = vld [vmem:[%s1848 + $0x58] sm:$0xff]
          %v2434 = vld [vmem:[%s1848 + $0x60] sm:$0xff]
          %v2435 = vld [vmem:[%s1848 + $0x68] sm:$0xff]
          %v2436 = vld [vmem:[%s1848 + $0x70] sm:$0xff]
          %v2437 = vld [vmem:[%s1848 + $0x78] sm:$0xff]
          %v2438 = vrcp.pop %v2422
          %v2439 = vrcp.pop %v2423
          %v2440 = vrcp.pop %v2424
          %v2441 = vrcp.pop %v2425
          %v2442 = vrcp.pop %v2426
          %v2443 = vrcp.pop %v2427
          %v2444 = vrcp.pop %v2428
          %v2445 = vrcp.pop %v2429
          %v2446 = vrcp.pop %v2430
          %v2447 = vrcp.pop %v2431
          %v2448 = vrcp.pop %v2432
          %v2449 = vrcp.pop %v2433
          %v2450 = vrcp.pop %v2434
          %v2451 = vrcp.pop %v2435
          %v2452 = vrcp.pop %v2436
          %v2453 = vrcp.pop %v2437
          %2455 = vset.pattern.permute.xlu0 0
          %2456 = vperm.xlu0 %2455, %v2438
          %v2457 = vpop.permute.xlu0 %2456
          %2460 = vset.pattern.permute.xlu0 0
          %2461 = vperm.xlu0 %2460, %v2439
          %v2462 = vpop.permute.xlu0 %2461
          %2465 = vset.pattern.permute.xlu0 0
          %2466 = vperm.xlu0 %2465, %v2440
          %v2467 = vpop.permute.xlu0 %2466
          %2470 = vset.pattern.permute.xlu0 0
          %2471 = vperm.xlu0 %2470, %v2441
          %v2472 = vpop.permute.xlu0 %2471
          %2475 = vset.pattern.permute.xlu0 0
          %2476 = vperm.xlu0 %2475, %v2442
          %v2477 = vpop.permute.xlu0 %2476
          %2480 = vset.pattern.permute.xlu0 0
          %2481 = vperm.xlu0 %2480, %v2443
          %v2482 = vpop.permute.xlu0 %2481
          %2485 = vset.pattern.permute.xlu0 0
          %2486 = vperm.xlu0 %2485, %v2444
          %v2487 = vpop.permute.xlu0 %2486
          %2490 = vset.pattern.permute.xlu0 0
          %2491 = vperm.xlu0 %2490, %v2445
          %v2492 = vpop.permute.xlu0 %2491
          %2495 = vset.pattern.permute.xlu0 0
          %2496 = vperm.xlu0 %2495, %v2446
          %v2497 = vpop.permute.xlu0 %2496
          %2500 = vset.pattern.permute.xlu0 0
          %2501 = vperm.xlu0 %2500, %v2447
          %v2502 = vpop.permute.xlu0 %2501
          %2505 = vset.pattern.permute.xlu0 0
          %2506 = vperm.xlu0 %2505, %v2448
          %v2507 = vpop.permute.xlu0 %2506
          %2510 = vset.pattern.permute.xlu0 0
          %2511 = vperm.xlu0 %2510, %v2449
          %v2512 = vpop.permute.xlu0 %2511
          %2515 = vset.pattern.permute.xlu0 0
          %2516 = vperm.xlu0 %2515, %v2450
          %v2517 = vpop.permute.xlu0 %2516
          %2520 = vset.pattern.permute.xlu0 0
          %2521 = vperm.xlu0 %2520, %v2451
          %v2522 = vpop.permute.xlu0 %2521
          %2525 = vset.pattern.permute.xlu0 0
          %2526 = vperm.xlu0 %2525, %v2452
          %v2527 = vpop.permute.xlu0 %2526
          %2530 = vset.pattern.permute.xlu0 0
          %2531 = vperm.xlu0 %2530, %v2453
          %v2532 = vpop.permute.xlu0 %2531
          %v2534 = vld [vmem:[#allocation5] sm:$0xff]
          %v2535 = vld [vmem:[#allocation5 + $0x8] sm:$0xff]
          %v2536 = vld [vmem:[#allocation5 + $0x10] sm:$0xff]
          %v2537 = vld [vmem:[#allocation5 + $0x18] sm:$0xff]
          %v2538 = vld [vmem:[#allocation5 + $0x20] sm:$0xff]
          %v2539 = vld [vmem:[#allocation5 + $0x28] sm:$0xff]
          %v2540 = vld [vmem:[#allocation5 + $0x30] sm:$0xff]
          %v2541 = vld [vmem:[#allocation5 + $0x38] sm:$0xff]
          %v2542 = vld [vmem:[#allocation5 + $0x40] sm:$0xff]
          %v2543 = vld [vmem:[#allocation5 + $0x48] sm:$0xff]
          %v2544 = vld [vmem:[#allocation5 + $0x50] sm:$0xff]
          %v2545 = vld [vmem:[#allocation5 + $0x58] sm:$0xff]
          %v2546 = vld [vmem:[#allocation5 + $0x60] sm:$0xff]
          %v2547 = vld [vmem:[#allocation5 + $0x68] sm:$0xff]
          %v2548 = vld [vmem:[#allocation5 + $0x70] sm:$0xff]
          %v2549 = vld [vmem:[#allocation5 + $0x78] sm:$0xff]
          %v2550 = vsel %vm658, %v2345, %v2457
          %v2551 = vsel %vm658, %v2350, %v2462
          %v2552 = vsel %vm658, %v2355, %v2467
          %v2553 = vsel %vm658, %v2360, %v2472
          %v2554 = vsel %vm658, %v2365, %v2477
          %v2555 = vsel %vm658, %v2370, %v2482
          %v2556 = vsel %vm658, %v2375, %v2487
          %v2557 = vsel %vm658, %v2380, %v2492
          %v2558 = vsel %vm658, %v2385, %v2497
          %v2559 = vsel %vm658, %v2390, %v2502
          %v2560 = vsel %vm658, %v2395, %v2507
          %v2561 = vsel %vm658, %v2400, %v2512
          %v2562 = vsel %vm658, %v2405, %v2517
          %v2563 = vsel %vm658, %v2410, %v2522
          %v2564 = vsel %vm658, %v2415, %v2527
          %v2565 = vsel %vm658, %v2420, %v2532
          %v2566 = vmul.f32 %v2534, %v2550
          %v2567 = vmul.f32 %v2535, %v2551
          %v2568 = vmul.f32 %v2536, %v2552
          %v2569 = vmul.f32 %v2537, %v2553
          %v2570 = vmul.f32 %v2538, %v2554
          %v2571 = vmul.f32 %v2539, %v2555
          %v2572 = vmul.f32 %v2540, %v2556
          %v2573 = vmul.f32 %v2541, %v2557
          %v2574 = vmul.f32 %v2542, %v2558
          %v2575 = vmul.f32 %v2543, %v2559
          %v2576 = vmul.f32 %v2544, %v2560
          %v2577 = vmul.f32 %v2545, %v2561
          %v2578 = vmul.f32 %v2546, %v2562
          %v2579 = vmul.f32 %v2547, %v2563
          %v2580 = vmul.f32 %v2548, %v2564
          %v2581 = vmul.f32 %v2549, %v2565
          %v2582 = vpack.c.bf16 %v2567, %v2566
          %v2583 = vpack.c.bf16 %v2569, %v2568
          %v2584 = vpack.c.bf16 %v2571, %v2570
          %v2585 = vpack.c.bf16 %v2573, %v2572
          %v2586 = vpack.c.bf16 %v2575, %v2574
          %v2587 = vpack.c.bf16 %v2577, %v2576
          %v2588 = vpack.c.bf16 %v2579, %v2578
          %v2589 = vpack.c.bf16 %v2581, %v2580
          %v2598 = vunpack.c.l.b16 %v2582
          %v2599 = vunpack.c.h.b16 %v2582
          %v2600 = vunpack.c.l.b16 %v2583
          %v2601 = vunpack.c.h.b16 %v2583
          %v2602 = vunpack.c.l.b16 %v2584
          %v2603 = vunpack.c.h.b16 %v2584
          %v2604 = vunpack.c.l.b16 %v2585
          %v2605 = vunpack.c.h.b16 %v2585
          %v2606 = vunpack.c.l.b16 %v2586
          %v2607 = vunpack.c.h.b16 %v2586
          %v2608 = vunpack.c.l.b16 %v2587
          %v2609 = vunpack.c.h.b16 %v2587
          %v2610 = vunpack.c.l.b16 %v2588
          %v2611 = vunpack.c.h.b16 %v2588
          %v2612 = vunpack.c.l.b16 %v2589
          %v2613 = vunpack.c.h.b16 %v2589
          %v2614 = vpack.c.b16 %v2598, %v2598
          %v2615 = vpack.c.b16 %v2599, %v2599
          %v2616 = vpack.c.b16 %v2600, %v2600
          %v2617 = vpack.c.b16 %v2601, %v2601
          %v2618 = vpack.c.b16 %v2602, %v2602
          %v2619 = vpack.c.b16 %v2603, %v2603
          %v2620 = vpack.c.b16 %v2604, %v2604
          %v2621 = vpack.c.b16 %v2605, %v2605
          %v2622 = vpack.c.b16 %v2606, %v2606
          %v2623 = vpack.c.b16 %v2607, %v2607
          %v2624 = vpack.c.b16 %v2608, %v2608
          %v2625 = vpack.c.b16 %v2609, %v2609
          %v2626 = vpack.c.b16 %v2610, %v2610
          %v2627 = vpack.c.b16 %v2611, %v2611
          %v2628 = vpack.c.b16 %v2612, %v2612
          %v2629 = vpack.c.b16 %v2613, %v2613
          %2646 = vst [vmem:[%s290] sm:$0xf] %v2614
          %2647 = vst [vmem:[%s290 + $0x4] sm:$0xf] %v2615
          %2648 = vst [vmem:[%s290 + $0x8] sm:$0xf] %v2616
          %2649 = vst [vmem:[%s290 + $0xc] sm:$0xf] %v2617
          %2650 = vst [vmem:[%s290 + $0x10] sm:$0xf] %v2618
          %2651 = vst [vmem:[%s290 + $0x14] sm:$0xf] %v2619
          %2652 = vst [vmem:[%s290 + $0x18] sm:$0xf] %v2620
          %2653 = vst [vmem:[%s290 + $0x1c] sm:$0xf] %v2621
          %2654 = vst [vmem:[%s290 + $0x20] sm:$0xf] %v2622
          %2655 = vst [vmem:[%s290 + $0x24] sm:$0xf] %v2623
          %2656 = vst [vmem:[%s290 + $0x28] sm:$0xf] %v2624
          %2657 = vst [vmem:[%s290 + $0x2c] sm:$0xf] %v2625
          %2658 = vst [vmem:[%s290 + $0x30] sm:$0xf] %v2626
          %2659 = vst [vmem:[%s290 + $0x34] sm:$0xf] %v2627
          %2660 = vst [vmem:[%s290 + $0x38] sm:$0xf] %v2628
          %2661 = vst [vmem:[%s290 + $0x3c] sm:$0xf] %v2629
        $region52: #{tpu_custom_call.1} parent=31 // pred_fallthru
          _
        %s2662 = sand.u32 %s132, 1
        %s2663 = scalar_lea.sflag [#allocation8], %s2662
        %s2664 = sand.u32 %s132, 1
        %s2665 = smul.addr %s2664, 64
        %s2666 = scalar_lea.vmem [#allocation12], %s2665
        // Predicated region
        $region53: #{tpu_custom_call.1} parent=31 // pred_check
          %p2667 = pneg %p142
        $region54: #{tpu_custom_call.1} parent=31 // pred_check_branch
          %2669 = sbr.rel (%p2667) target = $region56
        $region55: #{tpu_custom_call.1} parent=31 // pred_region
          %s2670 = smul.u32 16, %s29
          %s2672 = ssub.s32 1024, 1024
          %2673 = vsyncadd %s2663, %s2672
          %s2674 = smul.addr %s28, 32
          %s2675 = sadd.s32 %s2670, %s2674
          %s2676 = smul.addr %s2675, 64
          %s2677 = scalar_lea.hbm %s3, %s2676
          %s2678 = sshll.u32 %s2666, 4
          %s2679 = int_to_ptr.vmem [resolvable:$true] %s2678
          %2684 = dma.vmem_to_hbm [thread:$0]  %s2679, 1024, %s2677, %s2663, 64, 64, 4
        $region56: #{tpu_custom_call.1} parent=31 // pred_fallthru
          _
      $region32: #{tpu_custom_call.1} parent=5 // pred_fallthru
        _
      %p2685 = scmp.le.s32.totalorder 2, %s18
      // Predicated region
      $region57: #{tpu_custom_call.1} parent=5 // pred_check
        %p2686 = pneg %p2685
      $region58: #{tpu_custom_call.1} parent=5 // pred_check_branch
        %2688 = sbr.rel (%p2686) target = $region60
      $region59: #{tpu_custom_call.1} parent=5 // pred_region
        %s2689 = ssub.s32 %s18, 2
        // Predicated region
        $region61: #{tpu_custom_call.1} parent=59 // pred_check
          %p2690 = pneg %p148
        $region62: #{tpu_custom_call.1} parent=59 // pred_check_branch
          %2692 = sbr.rel (%p2690) target = $region64
        $region63: #{tpu_custom_call.1} parent=59 // pred_region
          %s2693 = sand.u32 %s133, 1
          %s2694 = scalar_lea.sflag [#allocation8], %s2693
          %s2695 = sand.u32 %s133, 1
          %s2696 = smul.addr %s2695, 64
          %s2697 = scalar_lea.vmem [#allocation12], %s2696
          %2698 = dma.done %s2694, 1024
        $region64: #{tpu_custom_call.1} parent=59 // pred_fallthru
          _
      $region60: #{tpu_custom_call.1} parent=5 // pred_fallthru
        _
    $region6: #{tpu_custom_call.1} parent=1 // loop_footer
      %s22 = sadd.s32 1, %s18
    $region7: #{tpu_custom_call.1} parent=1 // loop_footer_branch
      %17 = sbr.rel target = $region3
    $region8: #{tpu_custom_call.1} parent=1 // loop_exit
      _
    %2699 = vsyncpa [#allocation7], 1
    %s2700 = scalar_lea.sflag [#allocation7], 1
    %2701 = vsyncpa %s2700, 1
    %2702 = vsyncpa [#allocation10], 1
    %s2703 = scalar_lea.sflag [#allocation10], 1
    %2704 = vsyncpa %s2703, 1
    %2705 = vsyncpa [#allocation8], 1
    %s2706 = scalar_lea.sflag [#allocation8], 1
    %2707 = vsyncpa %s2706, 1

</llo_original>
